<compile_context>
chip_gen: v7x
topology: tpu7x:2x2x1
jax: 0.10.0
libtpu: 0.0.40
codegen_flags: <defaults>
</compile_context>

<pallas_src>
import functools

import jax
import jax.numpy as jnp
from jax import lax
from jax.experimental import pallas as pl
from jax.experimental.pallas import tpu as pltpu

NEG_SLOPE = 0.01   # nn.LeakyReLU default
LN_EPS = 1e-5      # nn.LayerNorm default

# Stacked per-layer parameter arrays, all resident in VMEM for the whole grid.
_PARAM_ORDER = ("Acc", "Atc", "Act", "Att",
                "W1z", "W1y", "b1", "g1", "B1",
                "W2s", "W2t", "b2", "g2", "B2",
                "W3s", "W3t", "b3s", "b3t")


# ----------------------------- kernel helpers -----------------------------

def _leaky_relu(h):
    return jnp.where(h >= 0, h, NEG_SLOPE * h)


def _layer_norm(v, g, b):
    # v: (H, Bt) in transposed layout -> LayerNorm over the feature (sublane)
    # axis, i.e. an XLU reduction, which overlaps with the MXU work for free.
    mu = jnp.mean(v, axis=0, keepdims=True)
    d = v - mu
    var = jnp.mean(d * d, axis=0, keepdims=True)
    return d * lax.rsqrt(var + LN_EPS) * g + b


# ------------------------- fused MetaBlock kernel ---------------------------

def _fused_metablock_kernel(H,
                            xc0_ref, xt0_ref, y_ref,
                            Acc_ref, Atc_ref, Act_ref, Att_ref,
                            W1z_ref, W1y_ref, b1_ref, g1_ref, B1_ref,
                            W2s_ref, W2t_ref, b2_ref, g2_ref, B2_ref,
                            W3s_ref, W3t_ref, b3s_ref, b3t_ref,
                            xc_out_ref, xt_out_ref, ld_ref,
                            xc_sc, xt_sc):
    l = pl.program_id(1)

    @pl.when(l == 0)
    def _():
        xc_sc[...] = xc0_ref[...]              # load this batch tile once
        xt_sc[...] = xt0_ref[...]
        ld_ref[...] = jnp.zeros_like(ld_ref)   # running -sum(s) accumulator

    def mm(w, a):
        # MXU matmul; weights may be bf16, accumulation always f32.
        return jnp.dot(w, a.astype(w.dtype), preferred_element_type=jnp.float32)

    xc = xc_sc[...]                            # (c_cond, Bt)
    xt = xt_sc[...]                            # (c_trans, Bt)

    # InvertiblePLU z = x @ W, pre-split into the four cond/trans blocks of W^T:
    # no concatenates and no misaligned lane slicing of the carried state.
    zc = mm(Acc_ref[l], xc) + mm(Atc_ref[l], xt)          # (c_cond, Bt)
    zt = mm(Act_ref[l], xc) + mm(Att_ref[l], xt)          # (c_trans, Bt)

    # Fused s/t MLP layer 1; the conditioning y term is computed in-kernel with
    # the resident W1y (no (L, B, 2H) yb1 HBM stream).
    h = mm(W1z_ref[l], zc) + mm(W1y_ref[l], y_ref[...]) + b1_ref[l]   # (2H, Bt)
    h = _leaky_relu(h)
    g1 = g1_ref[l]; B1 = B1_ref[l]
    hs = _layer_norm(h[:H], g1[:H], B1[:H])                # s-net half
    ht = _layer_norm(h[H:], g1[H:], B1[H:])                # t-net half

    # Layer 2: the two nets kept separate (half the MACs of a block-diagonal dot).
    b2 = b2_ref[l]; g2 = g2_ref[l]; B2 = B2_ref[l]
    hs = _layer_norm(_leaky_relu(mm(W2s_ref[l], hs) + b2[:H]), g2[:H], B2[:H])
    ht = _layer_norm(_leaky_relu(mm(W2t_ref[l], ht) + b2[H:]), g2[H:], B2[H:])

    # Layer 3 heads.
    s = mm(W3s_ref[l], hs) + b3s_ref[l]                    # (c_trans, Bt)
    t = mm(W3t_ref[l], ht) + b3t_ref[l]                    # (c_trans, Bt)

    xt_new = (zt - t) * jnp.exp(-s)

    # Carried state for the next layer (two aligned full-buffer stores).
    xc_sc[...] = zc
    xt_sc[...] = xt_new

    # Layer outputs, written straight from the values (lane-dense: batch on lanes).
    xc_out_ref[...] = zc
    xt_out_ref[...] = xt_new

    # Running log-det; the scalar PLU term is added once in the wrapper.
    ld_ref[...] = ld_ref[...] - jnp.sum(s, axis=0, keepdims=True)


# --------------------- wrapper-side parameter fusion ------------------------

def fuse_block_params(blocks_params, c_cond, mxu_dtype=jnp.float32):
    """Transpose/split/stack parameters over the layer axis (done once)."""

    def vec(a, b):        # (1,H)+(1,H) -> (2H,1) column vector (broadcast over lanes)
        return jnp.concatenate([a, b], axis=1).T

    def fuse_one(p):
        W = p["W"]
        sW1, sb1, sg1, sB1, sW2, sb2, sg2, sB2, sW3, sb3 = p["s_mlp"]
        tW1, tb1, tg1, tB1, tW2, tb2, tg2, tB2, tW3, tb3 = p["t_mlp"]
        W1T = jnp.concatenate([sW1.T, tW1.T], axis=0)      # (2H, c_cond + cond)
        return dict(
            # PLU weight split by cond/trans input rows and output columns (W^T).
            Acc=W[:c_cond, :c_cond].T.astype(mxu_dtype),
            Atc=W[c_cond:, :c_cond].T.astype(mxu_dtype),
            Act=W[:c_cond, c_cond:].T.astype(mxu_dtype),
            Att=W[c_cond:, c_cond:].T.astype(mxu_dtype),
            W1z=W1T[:, :c_cond].astype(mxu_dtype),
            W1y=W1T[:, c_cond:].astype(mxu_dtype),
            b1=vec(sb1, tb1), g1=vec(sg1, tg1), B1=vec(sB1, tB1),
            W2s=sW2.T.astype(mxu_dtype), W2t=tW2.T.astype(mxu_dtype),
            b2=vec(sb2, tb2), g2=vec(sg2, tg2), B2=vec(sB2, tB2),
            W3s=sW3.T.astype(mxu_dtype), W3t=tW3.T.astype(mxu_dtype),
            b3s=sb3.T, b3t=tb3.T,
            logdet=p["logdet"].reshape(()),
        )

    per_layer = [fuse_one(p) for p in blocks_params]
    return {k: jnp.stack([d[k] for d in per_layer]) for k in per_layer[0]}


# ------------------------------ pallas wrapper ------------------------------

def _pick_batch_tile(B):
    # Batch maps to the 128-lane axis.  Keep >=2 tiles when possible so the
    # "parallel" batch axis can shard across v7x's two TensorCores; 512 cap keeps
    # activations comfortably inside the per-generation VMEM budgets.
    if B < 256:
        return B
    tile = 512
    while tile * 2 > B:
        tile //= 2
    return max(tile, 128)


def _realnvp_pallas(xc0, xt0, yT, fp, H, batch_tile, return_intermediates):
    c_cond, Bp = xc0.shape
    c_trans = xt0.shape[0]
    COND = yT.shape[0]
    L = fp["Acc"].shape[0]
    C = c_cond + c_trans
    H2 = 2 * H
    nb = Bp // batch_tile

    def resident(arr):    # full-L block, constant index_map -> fetched once, kept in VMEM
        return pl.BlockSpec(arr.shape, lambda b, l: (0, 0, 0))

    in_specs = [
        pl.BlockSpec((c_cond, batch_tile), lambda b, l: (0, b)),     # x_cond (feat, batch)
        pl.BlockSpec((c_trans, batch_tile), lambda b, l: (0, b)),    # x_trans
        pl.BlockSpec((COND, batch_tile), lambda b, l: (0, b)),       # y
    ] + [resident(fp[k]) for k in _PARAM_ORDER]

    if return_intermediates:
        out_specs = (
            pl.BlockSpec((None, c_cond, batch_tile), lambda b, l: (l, 0, b)),
            pl.BlockSpec((None, c_trans, batch_tile), lambda b, l: (l, 0, b)),
            pl.BlockSpec((1, batch_tile), lambda b, l: (0, b)),
        )
        out_shape = (jax.ShapeDtypeStruct((L, c_cond, Bp), jnp.float32),
                     jax.ShapeDtypeStruct((L, c_trans, Bp), jnp.float32),
                     jax.ShapeDtypeStruct((1, Bp), jnp.float32))
    else:
        # Final-only: output blocks resident over the layer axis, one HBM writeback.
        out_specs = (
            pl.BlockSpec((c_cond, batch_tile), lambda b, l: (0, b)),
            pl.BlockSpec((c_trans, batch_tile), lambda b, l: (0, b)),
            pl.BlockSpec((1, batch_tile), lambda b, l: (0, b)),
        )
        out_shape = (jax.ShapeDtypeStruct((c_cond, Bp), jnp.float32),
                     jax.ShapeDtypeStruct((c_trans, Bp), jnp.float32),
                     jax.ShapeDtypeStruct((1, Bp), jnp.float32))

    param_bytes = sum(int(fp[k].size) * fp[k].dtype.itemsize for k in _PARAM_ORDER)
    act_bytes = 4 * batch_tile * (2 * (C + COND) + 3 * C + 12 * H)
    vmem_limit = int(min(max(2 * (param_bytes + act_bytes), 32 << 20), 48 << 20))

    flops = 2 * Bp * L * (C * C + (c_cond + COND) * H2 + 2 * H * H + H2 * c_trans)
    transcendentals = Bp * L * (c_trans + 4)
    out_rows = L if return_intermediates else 1
    bytes_accessed = param_bytes + 4 * Bp * (C + COND + out_rows * C + 1)

    return pl.pallas_call(
        functools.partial(_fused_metablock_kernel, H),
        out_shape=out_shape,
        grid_spec=pltpu.PrefetchScalarGridSpec(
            num_scalar_prefetch=0,
            grid=(nb, L),
            in_specs=in_specs,
            out_specs=out_specs,
            scratch_shapes=[pltpu.VMEM((c_cond, batch_tile), jnp.float32),
                            pltpu.VMEM((c_trans, batch_tile), jnp.float32)],
        ),
        compiler_params=pltpu.CompilerParams(
            dimension_semantics=("parallel", "arbitrary"),
            vmem_limit_bytes=vmem_limit),
        cost_estimate=pl.CostEstimate(flops=int(flops),
                                      transcendentals=int(transcendentals),
                                      bytes_accessed=int(bytes_accessed)),
    )(xc0, xt0, yT, *[fp[k] for k in _PARAM_ORDER])


def realnvp_forward(x, y, blocks_params, c_cond, batch_tile=None,
                    mxu_dtype=jnp.float32, return_intermediates=True):
    """Stack of MetaBlocks.  Returns (final x, per-layer outputs or None, log_dets)."""
    B, C = x.shape
    # mxu_dtype=jnp.bfloat16 feeds the MXU bf16 operands (f32 accumulation) for
    # v5e/v6e/v7x peak throughput; default f32 keeps bit-faithful semantics.
    fp = fuse_block_params(blocks_params, c_cond, mxu_dtype=mxu_dtype)
    H = fp["W2s"].shape[-1]

    if batch_tile is None:
        batch_tile = _pick_batch_tile(B)
    Bp = -(-B // batch_tile) * batch_tile

    # Transposed (feature x batch) layout: batch on the 128-lane axis.
    xc0 = x[:, :c_cond].T
    xt0 = x[:, c_cond:].T
    yT = y.T
    if Bp != B:                                   # pad batch instead of asserting
        pad = ((0, 0), (0, Bp - B))
        xc0 = jnp.pad(xc0, pad)
        xt0 = jnp.pad(xt0, pad)
        yT = jnp.pad(yT, pad)

    oc, ot, ld = _realnvp_pallas(xc0, xt0, yT, fp, H, batch_tile, return_intermediates)
    plu_logdet = jnp.sum(fp["logdet"])            # scalar PLU terms added once
    log_dets = ld[0, :B] + plu_logdet

    if return_intermediates:
        xs = jnp.concatenate([oc, ot], axis=1)            # (L, C, Bp)
        xs = jnp.transpose(xs, (0, 2, 1))[:, :B]          # (L, B, C)
        outputs = [xs[i] for i in range(xs.shape[0])]
        return outputs[-1], outputs, log_dets
    z = jnp.concatenate([oc, ot], axis=0).T[:B]           # (B, C)
    return z, None, log_dets


def metablock_forward(x, y, params, c_cond):
    """Single MetaBlock.forward(x, y) -> (x, log_det), as in the PyTorch spec."""
    z, _, log_det = realnvp_forward(x, y, [params], c_cond, return_intermediates=False)
    return z, log_det


# ----------------------------- deterministic init ---------------------------

def init_plu(key, C):
    # orthogonal init, then LU decomposition (matches InvertiblePLU.__init__)
    w = jax.random.normal(key, (C, C), jnp.float32)
    q, r = jnp.linalg.qr(w)
    q = q * jnp.sign(jnp.diag(r))[None, :]
    P, Lm, U = jax.scipy.linalg.lu(q)
    s = jnp.diag(U)
    Lm = jnp.tril(Lm, -1) + jnp.eye(C, dtype=jnp.float32)
    Um = jnp.triu(U - jnp.diag(s), 1) + jnp.diag(s)
    W = P @ Lm @ Um                    # forward-path weight (parameter glue)
    logdet = jnp.sum(jnp.log(jnp.abs(s))).reshape(1, 1)
    return W.astype(jnp.float32), logdet.astype(jnp.float32)


def init_linear(key, fan_in, fan_out, zero=False):
    # weights stored as (in, out); equivalent to torch's x @ weight.T
    if zero:
        return (jnp.zeros((fan_in, fan_out), jnp.float32),
                jnp.zeros((1, fan_out), jnp.float32))
    kw, kb = jax.random.split(key)
    bound = 1.0 / float(fan_in) ** 0.5
    W = jax.random.uniform(kw, (fan_in, fan_out), jnp.float32, -bound, bound)
    b = jax.random.uniform(kb, (1, fan_out), jnp.float32, -bound, bound)
    return W, b


def init_mlp(key, fin, hid, fout, zero_last=True):
    k1, k2, k3 = jax.random.split(key, 3)
    W1, b1 = init_linear(k1, fin, hid)
    W2, b2 = init_linear(k2, hid, hid)
    W3, b3 = init_linear(k3, hid, fout, zero=zero_last)   # module zero-inits layer 3
    g1, B1 = jnp.ones((1, hid), jnp.float32), jnp.zeros((1, hid), jnp.float32)
    g2, B2 = jnp.ones((1, hid), jnp.float32), jnp.zeros((1, hid), jnp.float32)
    return [W1, b1, g1, B1, W2, b2, g2, B2, W3, b3]


# ----------------------- pure-JAX (unfused) reference ------------------------

def _mlp_ref(h, p):
    W1, b1, g1, B1, W2, b2, g2, B2, W3, b3 = p

    def ln(v, g, bb):
        mu = jnp.mean(v, axis=-1, keepdims=True)
        var = jnp.mean(jnp.square(v - mu), axis=-1, keepdims=True)
        return (v - mu) * lax.rsqrt(var + LN_EPS) * g + bb

    h = jnp.dot(h, W1) + b1
    h = ln(jnp.where(h >= 0, h, NEG_SLOPE * h), g1, B1)
    h = jnp.dot(h, W2) + b2
    h = ln(jnp.where(h >= 0, h, NEG_SLOPE * h), g2, B2)
    return jnp.dot(h, W3) + b3


def realnvp_reference(x, y, blocks_params, c_cond):
    ld = jnp.zeros((x.shape[0],), jnp.float32)
    outs = []
    for p in blocks_params:
        z = x @ p["W"]
        x_cond, x_trans = z[:, :c_cond], z[:, c_cond:]
        h_in = jnp.concatenate([x_cond, y], axis=-1)
        s = _mlp_ref(h_in, p["s_mlp"])
        t = _mlp_ref(h_in, p["t_mlp"])
        x = jnp.concatenate([x_cond, (x_trans - t) * jnp.exp(-s)], axis=-1)
        ld = ld + p["logdet"][0, 0] - jnp.sum(s, axis=-1)
        outs.append(x)
    return x, outs, ld


# ------------------------------------ main ----------------------------------

if __name__ == "__main__":
    B, C, H, COND, NLAYERS = 8, 4, 32, 4, 2
    c_cond = -(-C // 2)          # ceil(C/2): size of x_cond chunk (tensor_split)
    c_trans = C // 2

    key = jax.random.PRNGKey(0)
    kx, ky, kp = jax.random.split(key, 3)
    x = jax.random.normal(kx, (B, C), jnp.float32)
    y = jax.random.normal(ky, (B, COND), jnp.float32)

    blocks = []
    for i in range(NLAYERS):
        kb = jax.random.fold_in(kp, i)
        k_plu, k_s, k_t = jax.random.split(kb, 3)
        W, logdet = init_plu(k_plu, C)
        blocks.append(dict(
            W=W, logdet=logdet,
            # zero_last=False so the s/t MLP path is numerically exercised here
            # (the PyTorch module zero-inits layer 3, which makes s = t = 0).
            s_mlp=init_mlp(k_s, c_cond + COND, H, c_trans, zero_last=False),
            t_mlp=init_mlp(k_t, c_cond + COND, H, c_trans, zero_last=False),
        ))

    # Full stack with per-layer intermediates.
    fwd = jax.jit(lambda xx, yy, bb: realnvp_forward(xx, yy, bb, c_cond))
    z, outputs, log_dets = fwd(x, y, blocks)
    jax.block_until_ready((z, outputs, log_dets))
    assert z.shape == (B, C) and log_dets.shape == (B,) and len(outputs) == NLAYERS

    # Validate against an unfused pure-JAX reference of the original module math.
    z_ref, outs_ref, ld_exp = realnvp_reference(x, y, blocks, c_cond)
    assert jnp.allclose(z, z_ref, atol=5e-2, rtol=5e-2), "z mismatch"
    assert jnp.allclose(log_dets, ld_exp, atol=5e-2, rtol=5e-2), "log_det mismatch"
    for o, orf in zip(outputs, outs_ref):
        assert jnp.allclose(o, orf, atol=5e-2, rtol=5e-2), "per-layer output mismatch"

    # Final-output-only path (no per-layer HBM writeback).
    fwd_final = jax.jit(lambda xx, yy, bb: realnvp_forward(
        xx, yy, bb, c_cond, return_intermediates=False))
    z2, _, ld2 = fwd_final(x, y, blocks)
    jax.block_until_ready((z2, ld2))
    assert jnp.allclose(z2, z_ref, atol=5e-2, rtol=5e-2), "z mismatch (final-only)"
    assert jnp.allclose(ld2, ld_exp, atol=5e-2, rtol=5e-2), "log_det mismatch (final-only)"

    # Single MetaBlock — the actual PyTorch spec: forward(x, y) -> (x, log_det).
    z1, ld1 = jax.jit(lambda xx, yy: metablock_forward(xx, yy, blocks[0], c_cond))(x, y)
    jax.block_until_ready((z1, ld1))
    z1_ref, _, ld1_ref = realnvp_reference(x, y, blocks[:1], c_cond)
    assert jnp.allclose(z1, z1_ref, atol=5e-2, rtol=5e-2), "MetaBlock z mismatch"
    assert jnp.allclose(ld1, ld1_ref, atol=5e-2, rtol=5e-2), "MetaBlock log_det mismatch"

    # TODO(synk): MetaBlock.reverse / InvertiblePLU.reverse (triangular solves) are
    # not implemented; only forward() was requested.
    print("KERNEL_OK")
</pallas_src>

<mosaic_0001>
module attributes {stable_mosaic.version = 11 : i64} {
  func.func @_fused_metablock_kernel(%arg0: i32, %arg1: i32, %arg2: memref<2x8xf32, #tpu.memory_space<vmem>>, %arg3: memref<2x8xf32, #tpu.memory_space<vmem>>, %arg4: memref<4x8xf32, #tpu.memory_space<vmem>>, %arg5: memref<2x2x2xf32, #tpu.memory_space<vmem>>, %arg6: memref<2x2x2xf32, #tpu.memory_space<vmem>>, %arg7: memref<2x2x2xf32, #tpu.memory_space<vmem>>, %arg8: memref<2x2x2xf32, #tpu.memory_space<vmem>>, %arg9: memref<2x64x2xf32, #tpu.memory_space<vmem>>, %arg10: memref<2x64x4xf32, #tpu.memory_space<vmem>>, %arg11: memref<2x64x1xf32, #tpu.memory_space<vmem>>, %arg12: memref<2x64x1xf32, #tpu.memory_space<vmem>>, %arg13: memref<2x64x1xf32, #tpu.memory_space<vmem>>, %arg14: memref<2x32x32xf32, #tpu.memory_space<vmem>>, %arg15: memref<2x32x32xf32, #tpu.memory_space<vmem>>, %arg16: memref<2x64x1xf32, #tpu.memory_space<vmem>>, %arg17: memref<2x64x1xf32, #tpu.memory_space<vmem>>, %arg18: memref<2x64x1xf32, #tpu.memory_space<vmem>>, %arg19: memref<2x2x32xf32, #tpu.memory_space<vmem>>, %arg20: memref<2x2x32xf32, #tpu.memory_space<vmem>>, %arg21: memref<2x2x1xf32, #tpu.memory_space<vmem>>, %arg22: memref<2x2x1xf32, #tpu.memory_space<vmem>>, %arg23: memref<1x2x8xf32, #tpu.memory_space<vmem>>, %arg24: memref<1x2x8xf32, #tpu.memory_space<vmem>>, %arg25: memref<1x8xf32, #tpu.memory_space<vmem>>, %arg26: memref<2x8xf32, #tpu.memory_space<vmem>>, %arg27: memref<2x8xf32, #tpu.memory_space<vmem>>) attributes {dimension_semantics = [#tpu.dimension_semantics<parallel>, #tpu.dimension_semantics<arbitrary>], iteration_bounds = array<i64: 1, 2>, scalar_prefetch = 0 : i64, scratch_operands = 2 : i64, tpu.core_type = #tpu.core_type<tc>, window_params = [{transform_indices = @transform_0, window_bounds = array<i64: 2, 8>}, {transform_indices = @transform_1, window_bounds = array<i64: 2, 8>}, {transform_indices = @transform_2, window_bounds = array<i64: 4, 8>}, {pipeline_mode = #tpu.pipeline_mode<synchronous>, transform_indices = @transform_3, window_bounds = array<i64: 2, 2, 2>}, {pipeline_mode = #tpu.pipeline_mode<synchronous>, transform_indices = @transform_4, window_bounds = array<i64: 2, 2, 2>}, {pipeline_mode = #tpu.pipeline_mode<synchronous>, transform_indices = @transform_5, window_bounds = array<i64: 2, 2, 2>}, {pipeline_mode = #tpu.pipeline_mode<synchronous>, transform_indices = @transform_6, window_bounds = array<i64: 2, 2, 2>}, {pipeline_mode = #tpu.pipeline_mode<synchronous>, transform_indices = @transform_7, window_bounds = array<i64: 2, 64, 2>}, {pipeline_mode = #tpu.pipeline_mode<synchronous>, transform_indices = @transform_8, window_bounds = array<i64: 2, 64, 4>}, {pipeline_mode = #tpu.pipeline_mode<synchronous>, transform_indices = @transform_9, window_bounds = array<i64: 2, 64, 1>}, {pipeline_mode = #tpu.pipeline_mode<synchronous>, transform_indices = @transform_10, window_bounds = array<i64: 2, 64, 1>}, {pipeline_mode = #tpu.pipeline_mode<synchronous>, transform_indices = @transform_11, window_bounds = array<i64: 2, 64, 1>}, {pipeline_mode = #tpu.pipeline_mode<synchronous>, transform_indices = @transform_12, window_bounds = array<i64: 2, 32, 32>}, {pipeline_mode = #tpu.pipeline_mode<synchronous>, transform_indices = @transform_13, window_bounds = array<i64: 2, 32, 32>}, {pipeline_mode = #tpu.pipeline_mode<synchronous>, transform_indices = @transform_14, window_bounds = array<i64: 2, 64, 1>}, {pipeline_mode = #tpu.pipeline_mode<synchronous>, transform_indices = @transform_15, window_bounds = array<i64: 2, 64, 1>}, {pipeline_mode = #tpu.pipeline_mode<synchronous>, transform_indices = @transform_16, window_bounds = array<i64: 2, 64, 1>}, {pipeline_mode = #tpu.pipeline_mode<synchronous>, transform_indices = @transform_17, window_bounds = array<i64: 2, 2, 32>}, {pipeline_mode = #tpu.pipeline_mode<synchronous>, transform_indices = @transform_18, window_bounds = array<i64: 2, 2, 32>}, {pipeline_mode = #tpu.pipeline_mode<synchronous>, transform_indices = @transform_19, window_bounds = array<i64: 2, 2, 1>}, {pipeline_mode = #tpu.pipeline_mode<synchronous>, transform_indices = @transform_20, window_bounds = array<i64: 2, 2, 1>}, {transform_indices = @transform_21, window_bounds = array<i64: 1, 2, 8>}, {transform_indices = @transform_22, window_bounds = array<i64: 1, 2, 8>}, {transform_indices = @transform_23, window_bounds = array<i64: 1, 8>}]} {
    %c0_i32 = arith.constant 0 : i32
    %0 = arith.cmpi eq, %arg1, %c0_i32 : i32
    %1 = arith.extui %0 : i1 to i32
    %c0_i32_0 = arith.constant 0 : i32
    %2 = arith.cmpi ne, %1, %c0_i32_0 : i32
    scf.if %2 {
      %c0_93 = arith.constant 0 : index
      %c0_94 = arith.constant 0 : index
      %208 = vector.load %arg2[%c0_93, %c0_94] : memref<2x8xf32, #tpu.memory_space<vmem>>, vector<2x8xf32>
      %c0_95 = arith.constant 0 : index
      %c0_96 = arith.constant 0 : index
      %209 = vector.load %arg26[%c0_95, %c0_96] : memref<2x8xf32, #tpu.memory_space<vmem>>, vector<2x8xf32>
      tpu.vector_store %arg26[%c0_95, %c0_96], %208 {strides = array<i32>} : memref<2x8xf32, #tpu.memory_space<vmem>>, vector<2x8xf32>,
      %c0_97 = arith.constant 0 : index
      %c0_98 = arith.constant 0 : index
      %210 = vector.load %arg3[%c0_97, %c0_98] : memref<2x8xf32, #tpu.memory_space<vmem>>, vector<2x8xf32>
      %c0_99 = arith.constant 0 : index
      %c0_100 = arith.constant 0 : index
      %211 = vector.load %arg27[%c0_99, %c0_100] : memref<2x8xf32, #tpu.memory_space<vmem>>, vector<2x8xf32>
      tpu.vector_store %arg27[%c0_99, %c0_100], %210 {strides = array<i32>} : memref<2x8xf32, #tpu.memory_space<vmem>>, vector<2x8xf32>,
      %cst_101 = arith.constant 0.000000e+00 : f32
      %212 = vector.broadcast %cst_101 : f32 to vector<1x8xf32>
      %c0_102 = arith.constant 0 : index
      %c0_103 = arith.constant 0 : index
      %213 = vector.load %arg25[%c0_102, %c0_103] : memref<1x8xf32, #tpu.memory_space<vmem>>, vector<1x8xf32>
      tpu.vector_store %arg25[%c0_102, %c0_103], %212 {strides = array<i32>} : memref<1x8xf32, #tpu.memory_space<vmem>>, vector<1x8xf32>,
    } else {
    }
    %c0 = arith.constant 0 : index
    %c0_1 = arith.constant 0 : index
    %3 = vector.load %arg26[%c0, %c0_1] : memref<2x8xf32, #tpu.memory_space<vmem>>, vector<2x8xf32>
    %c0_2 = arith.constant 0 : index
    %c0_3 = arith.constant 0 : index
    %4 = vector.load %arg27[%c0_2, %c0_3] : memref<2x8xf32, #tpu.memory_space<vmem>>, vector<2x8xf32>
    %5 = arith.index_cast %arg1 : i32 to index
    %c0_4 = arith.constant 0 : index
    %c0_5 = arith.constant 0 : index
    %6 = vector.load %arg5[%5, %c0_4, %c0_5] : memref<2x2x2xf32, #tpu.memory_space<vmem>>, vector<1x2x2xf32>
    %7 = vector.shape_cast %6 : vector<1x2x2xf32> to vector<2x2xf32>
    %cst = arith.constant dense<0.000000e+00> : vector<2x8xf32>
    %8 = tpu.matmul %7, %3, %cst {dimension_numbers = #tpu.dot_dimension_numbers<[1], [0], [0], [1], [0, 0, 1, 1], [], []>} : vector<2x2xf32>, vector<2x8xf32>, vector<2x8xf32> -> vector<2x8xf32>
    %9 = arith.index_cast %arg1 : i32 to index
    %c0_6 = arith.constant 0 : index
    %c0_7 = arith.constant 0 : index
    %10 = vector.load %arg6[%9, %c0_6, %c0_7] : memref<2x2x2xf32, #tpu.memory_space<vmem>>, vector<1x2x2xf32>
    %11 = vector.shape_cast %10 : vector<1x2x2xf32> to vector<2x2xf32>
    %cst_8 = arith.constant dense<0.000000e+00> : vector<2x8xf32>
    %12 = tpu.matmul %11, %4, %cst_8 {dimension_numbers = #tpu.dot_dimension_numbers<[1], [0], [0], [1], [0, 0, 1, 1], [], []>} : vector<2x2xf32>, vector<2x8xf32>, vector<2x8xf32> -> vector<2x8xf32>
    %13 = arith.addf %8, %12 : vector<2x8xf32>
    %14 = arith.index_cast %arg1 : i32 to index
    %c0_9 = arith.constant 0 : index
    %c0_10 = arith.constant 0 : index
    %15 = vector.load %arg7[%14, %c0_9, %c0_10] : memref<2x2x2xf32, #tpu.memory_space<vmem>>, vector<1x2x2xf32>
    %16 = vector.shape_cast %15 : vector<1x2x2xf32> to vector<2x2xf32>
    %cst_11 = arith.constant dense<0.000000e+00> : vector<2x8xf32>
    %17 = tpu.matmul %16, %3, %cst_11 {dimension_numbers = #tpu.dot_dimension_numbers<[1], [0], [0], [1], [0, 0, 1, 1], [], []>} : vector<2x2xf32>, vector<2x8xf32>, vector<2x8xf32> -> vector<2x8xf32>
    %18 = arith.index_cast %arg1 : i32 to index
    %c0_12 = arith.constant 0 : index
    %c0_13 = arith.constant 0 : index
    %19 = vector.load %arg8[%18, %c0_12, %c0_13] : memref<2x2x2xf32, #tpu.memory_space<vmem>>, vector<1x2x2xf32>
    %20 = vector.shape_cast %19 : vector<1x2x2xf32> to vector<2x2xf32>
    %cst_14 = arith.constant dense<0.000000e+00> : vector<2x8xf32>
    %21 = tpu.matmul %20, %4, %cst_14 {dimension_numbers = #tpu.dot_dimension_numbers<[1], [0], [0], [1], [0, 0, 1, 1], [], []>} : vector<2x2xf32>, vector<2x8xf32>, vector<2x8xf32> -> vector<2x8xf32>
    %22 = arith.addf %17, %21 : vector<2x8xf32>
    %23 = arith.index_cast %arg1 : i32 to index
    %c0_15 = arith.constant 0 : index
    %c0_16 = arith.constant 0 : index
    %24 = vector.load %arg9[%23, %c0_15, %c0_16] : memref<2x64x2xf32, #tpu.memory_space<vmem>>, vector<1x64x2xf32>
    %25 = vector.shape_cast %24 : vector<1x64x2xf32> to vector<64x2xf32>
    %cst_17 = arith.constant dense<0.000000e+00> : vector<64x8xf32>
    %26 = tpu.matmul %25, %13, %cst_17 {dimension_numbers = #tpu.dot_dimension_numbers<[1], [0], [0], [1], [0, 0, 1, 1], [], []>} : vector<64x2xf32>, vector<2x8xf32>, vector<64x8xf32> -> vector<64x8xf32>
    %27 = arith.index_cast %arg1 : i32 to index
    %c0_18 = arith.constant 0 : index
    %c0_19 = arith.constant 0 : index
    %28 = vector.load %arg10[%27, %c0_18, %c0_19] : memref<2x64x4xf32, #tpu.memory_space<vmem>>, vector<1x64x4xf32>
    %29 = vector.shape_cast %28 : vector<1x64x4xf32> to vector<64x4xf32>
    %c0_20 = arith.constant 0 : index
    %c0_21 = arith.constant 0 : index
    %30 = vector.load %arg4[%c0_20, %c0_21] : memref<4x8xf32, #tpu.memory_space<vmem>>, vector<4x8xf32>
    %cst_22 = arith.constant dense<0.000000e+00> : vector<64x8xf32>
    %31 = tpu.matmul %29, %30, %cst_22 {dimension_numbers = #tpu.dot_dimension_numbers<[1], [0], [0], [1], [0, 0, 1, 1], [], []>} : vector<64x4xf32>, vector<4x8xf32>, vector<64x8xf32> -> vector<64x8xf32>
    %32 = arith.addf %26, %31 : vector<64x8xf32>
    %33 = arith.index_cast %arg1 : i32 to index
    %c0_23 = arith.constant 0 : index
    %c0_24 = arith.constant 0 : index
    %34 = vector.load %arg11[%33, %c0_23, %c0_24] : memref<2x64x1xf32, #tpu.memory_space<vmem>>, vector<1x64x1xf32>
    %35 = vector.shape_cast %34 : vector<1x64x1xf32> to vector<64x1xf32>
    %36 = vector.broadcast %35 : vector<64x1xf32> to vector<64x8xf32>
    %37 = arith.addf %32, %36 : vector<64x8xf32>
    %cst_25 = arith.constant 0.000000e+00 : f32
    %38 = vector.broadcast %cst_25 : f32 to vector<64x8xf32>
    %39 = arith.cmpf oge, %37, %38 : vector<64x8xf32>
    %cst_26 = arith.constant 0.00999999977 : f32
    %40 = vector.broadcast %cst_26 : f32 to vector<64x8xf32>
    %41 = arith.mulf %40, %37 : vector<64x8xf32>
    %42 = arith.select %39, %37, %41 : vector<64x8xi1>, vector<64x8xf32>
    %43 = arith.index_cast %arg1 : i32 to index
    %c0_27 = arith.constant 0 : index
    %c0_28 = arith.constant 0 : index
    %44 = vector.load %arg12[%43, %c0_27, %c0_28] : memref<2x64x1xf32, #tpu.memory_space<vmem>>, vector<1x64x1xf32>
    %45 = vector.shape_cast %44 : vector<1x64x1xf32> to vector<64x1xf32>
    %46 = arith.index_cast %arg1 : i32 to index
    %c0_29 = arith.constant 0 : index
    %c0_30 = arith.constant 0 : index
    %47 = vector.load %arg13[%46, %c0_29, %c0_30] : memref<2x64x1xf32, #tpu.memory_space<vmem>>, vector<1x64x1xf32>
    %48 = vector.shape_cast %47 : vector<1x64x1xf32> to vector<64x1xf32>
    %49 = vector.extract_strided_slice %42 {offsets = [0, 0], sizes = [32, 8], strides = [1, 1]} : vector<64x8xf32> to vector<32x8xf32>
    %50 = vector.extract_strided_slice %45 {offsets = [0, 0], sizes = [32, 1], strides = [1, 1]} : vector<64x1xf32> to vector<32x1xf32>
    %51 = vector.extract_strided_slice %48 {offsets = [0, 0], sizes = [32, 1], strides = [1, 1]} : vector<64x1xf32> to vector<32x1xf32>
    %cst_31 = arith.constant dense<0.000000e+00> : vector<8xf32>
    %52 = vector.multi_reduction <add>, %49, %cst_31 [0] : vector<32x8xf32> to vector<8xf32>
    %53 = vector.shape_cast %52 : vector<8xf32> to vector<1x8xf32>
    %cst_32 = arith.constant 3.200000e+01 : f32
    %54 = vector.broadcast %cst_32 : f32 to vector<1x8xf32>
    %55 = arith.divf %53, %54 : vector<1x8xf32>
    %56 = vector.broadcast %55 : vector<1x8xf32> to vector<32x8xf32>
    %57 = arith.subf %49, %56 : vector<32x8xf32>
    %58 = arith.mulf %57, %57 : vector<32x8xf32>
    %cst_33 = arith.constant dense<0.000000e+00> : vector<8xf32>
    %59 = vector.multi_reduction <add>, %58, %cst_33 [0] : vector<32x8xf32> to vector<8xf32>
    %60 = vector.shape_cast %59 : vector<8xf32> to vector<1x8xf32>
    %cst_34 = arith.constant 3.200000e+01 : f32
    %61 = vector.broadcast %cst_34 : f32 to vector<1x8xf32>
    %62 = arith.divf %60, %61 : vector<1x8xf32>
    %cst_35 = arith.constant 9.99999974E-6 : f32
    %63 = vector.broadcast %cst_35 : f32 to vector<1x8xf32>
    %64 = arith.addf %62, %63 : vector<1x8xf32>
    %65 = math.rsqrt %64 : vector<1x8xf32>
    %66 = vector.broadcast %65 : vector<1x8xf32> to vector<32x8xf32>
    %67 = arith.mulf %57, %66 : vector<32x8xf32>
    %68 = vector.broadcast %50 : vector<32x1xf32> to vector<32x8xf32>
    %69 = arith.mulf %67, %68 : vector<32x8xf32>
    %70 = vector.broadcast %51 : vector<32x1xf32> to vector<32x8xf32>
    %71 = arith.addf %69, %70 : vector<32x8xf32>
    %72 = vector.extract_strided_slice %42 {offsets = [32, 0], sizes = [32, 8], strides = [1, 1]} : vector<64x8xf32> to vector<32x8xf32>
    %73 = vector.extract_strided_slice %45 {offsets = [32, 0], sizes = [32, 1], strides = [1, 1]} : vector<64x1xf32> to vector<32x1xf32>
    %74 = vector.extract_strided_slice %48 {offsets = [32, 0], sizes = [32, 1], strides = [1, 1]} : vector<64x1xf32> to vector<32x1xf32>
    %cst_36 = arith.constant dense<0.000000e+00> : vector<8xf32>
    %75 = vector.multi_reduction <add>, %72, %cst_36 [0] : vector<32x8xf32> to vector<8xf32>
    %76 = vector.shape_cast %75 : vector<8xf32> to vector<1x8xf32>
    %cst_37 = arith.constant 3.200000e+01 : f32
    %77 = vector.broadcast %cst_37 : f32 to vector<1x8xf32>
    %78 = arith.divf %76, %77 : vector<1x8xf32>
    %79 = vector.broadcast %78 : vector<1x8xf32> to vector<32x8xf32>
    %80 = arith.subf %72, %79 : vector<32x8xf32>
    %81 = arith.mulf %80, %80 : vector<32x8xf32>
    %cst_38 = arith.constant dense<0.000000e+00> : vector<8xf32>
    %82 = vector.multi_reduction <add>, %81, %cst_38 [0] : vector<32x8xf32> to vector<8xf32>
    %83 = vector.shape_cast %82 : vector<8xf32> to vector<1x8xf32>
    %cst_39 = arith.constant 3.200000e+01 : f32
    %84 = vector.broadcast %cst_39 : f32 to vector<1x8xf32>
    %85 = arith.divf %83, %84 : vector<1x8xf32>
    %cst_40 = arith.constant 9.99999974E-6 : f32
    %86 = vector.broadcast %cst_40 : f32 to vector<1x8xf32>
    %87 = arith.addf %85, %86 : vector<1x8xf32>
    %88 = math.rsqrt %87 : vector<1x8xf32>
    %89 = vector.broadcast %88 : vector<1x8xf32> to vector<32x8xf32>
    %90 = arith.mulf %80, %89 : vector<32x8xf32>
    %91 = vector.broadcast %73 : vector<32x1xf32> to vector<32x8xf32>
    %92 = arith.mulf %90, %91 : vector<32x8xf32>
    %93 = vector.broadcast %74 : vector<32x1xf32> to vector<32x8xf32>
    %94 = arith.addf %92, %93 : vector<32x8xf32>
    %95 = arith.index_cast %arg1 : i32 to index
    %c0_41 = arith.constant 0 : index
    %c0_42 = arith.constant 0 : index
    %96 = vector.load %arg16[%95, %c0_41, %c0_42] : memref<2x64x1xf32, #tpu.memory_space<vmem>>, vector<1x64x1xf32>
    %97 = vector.shape_cast %96 : vector<1x64x1xf32> to vector<64x1xf32>
    %98 = arith.index_cast %arg1 : i32 to index
    %c0_43 = arith.constant 0 : index
    %c0_44 = arith.constant 0 : index
    %99 = vector.load %arg17[%98, %c0_43, %c0_44] : memref<2x64x1xf32, #tpu.memory_space<vmem>>, vector<1x64x1xf32>
    %100 = vector.shape_cast %99 : vector<1x64x1xf32> to vector<64x1xf32>
    %101 = arith.index_cast %arg1 : i32 to index
    %c0_45 = arith.constant 0 : index
    %c0_46 = arith.constant 0 : index
    %102 = vector.load %arg18[%101, %c0_45, %c0_46] : memref<2x64x1xf32, #tpu.memory_space<vmem>>, vector<1x64x1xf32>
    %103 = vector.shape_cast %102 : vector<1x64x1xf32> to vector<64x1xf32>
    %104 = arith.index_cast %arg1 : i32 to index
    %c0_47 = arith.constant 0 : index
    %c0_48 = arith.constant 0 : index
    %105 = vector.load %arg14[%104, %c0_47, %c0_48] : memref<2x32x32xf32, #tpu.memory_space<vmem>>, vector<1x32x32xf32>
    %106 = vector.shape_cast %105 : vector<1x32x32xf32> to vector<32x32xf32>
    %cst_49 = arith.constant dense<0.000000e+00> : vector<32x8xf32>
    %107 = tpu.matmul %106, %71, %cst_49 {dimension_numbers = #tpu.dot_dimension_numbers<[1], [0], [0], [1], [0, 0, 1, 1], [], []>} : vector<32x32xf32>, vector<32x8xf32>, vector<32x8xf32> -> vector<32x8xf32>
    %108 = vector.extract_strided_slice %97 {offsets = [0, 0], sizes = [32, 1], strides = [1, 1]} : vector<64x1xf32> to vector<32x1xf32>
    %109 = vector.broadcast %108 : vector<32x1xf32> to vector<32x8xf32>
    %110 = arith.addf %107, %109 : vector<32x8xf32>
    %cst_50 = arith.constant 0.000000e+00 : f32
    %111 = vector.broadcast %cst_50 : f32 to vector<32x8xf32>
    %112 = arith.cmpf oge, %110, %111 : vector<32x8xf32>
    %cst_51 = arith.constant 0.00999999977 : f32
    %113 = vector.broadcast %cst_51 : f32 to vector<32x8xf32>
    %114 = arith.mulf %113, %110 : vector<32x8xf32>
    %115 = arith.select %112, %110, %114 : vector<32x8xi1>, vector<32x8xf32>
    %116 = vector.extract_strided_slice %100 {offsets = [0, 0], sizes = [32, 1], strides = [1, 1]} : vector<64x1xf32> to vector<32x1xf32>
    %117 = vector.extract_strided_slice %103 {offsets = [0, 0], sizes = [32, 1], strides = [1, 1]} : vector<64x1xf32> to vector<32x1xf32>
    %cst_52 = arith.constant dense<0.000000e+00> : vector<8xf32>
    %118 = vector.multi_reduction <add>, %115, %cst_52 [0] : vector<32x8xf32> to vector<8xf32>
    %119 = vector.shape_cast %118 : vector<8xf32> to vector<1x8xf32>
    %cst_53 = arith.constant 3.200000e+01 : f32
    %120 = vector.broadcast %cst_53 : f32 to vector<1x8xf32>
    %121 = arith.divf %119, %120 : vector<1x8xf32>
    %122 = vector.broadcast %121 : vector<1x8xf32> to vector<32x8xf32>
    %123 = arith.subf %115, %122 : vector<32x8xf32>
    %124 = arith.mulf %123, %123 : vector<32x8xf32>
    %cst_54 = arith.constant dense<0.000000e+00> : vector<8xf32>
    %125 = vector.multi_reduction <add>, %124, %cst_54 [0] : vector<32x8xf32> to vector<8xf32>
    %126 = vector.shape_cast %125 : vector<8xf32> to vector<1x8xf32>
    %cst_55 = arith.constant 3.200000e+01 : f32
    %127 = vector.broadcast %cst_55 : f32 to vector<1x8xf32>
    %128 = arith.divf %126, %127 : vector<1x8xf32>
    %cst_56 = arith.constant 9.99999974E-6 : f32
    %129 = vector.broadcast %cst_56 : f32 to vector<1x8xf32>
    %130 = arith.addf %128, %129 : vector<1x8xf32>
    %131 = math.rsqrt %130 : vector<1x8xf32>
    %132 = vector.broadcast %131 : vector<1x8xf32> to vector<32x8xf32>
    %133 = arith.mulf %123, %132 : vector<32x8xf32>
    %134 = vector.broadcast %116 : vector<32x1xf32> to vector<32x8xf32>
    %135 = arith.mulf %133, %134 : vector<32x8xf32>
    %136 = vector.broadcast %117 : vector<32x1xf32> to vector<32x8xf32>
    %137 = arith.addf %135, %136 : vector<32x8xf32>
    %138 = arith.index_cast %arg1 : i32 to index
    %c0_57 = arith.constant 0 : index
    %c0_58 = arith.constant 0 : index
    %139 = vector.load %arg15[%138, %c0_57, %c0_58] : memref<2x32x32xf32, #tpu.memory_space<vmem>>, vector<1x32x32xf32>
    %140 = vector.shape_cast %139 : vector<1x32x32xf32> to vector<32x32xf32>
    %cst_59 = arith.constant dense<0.000000e+00> : vector<32x8xf32>
    %141 = tpu.matmul %140, %94, %cst_59 {dimension_numbers = #tpu.dot_dimension_numbers<[1], [0], [0], [1], [0, 0, 1, 1], [], []>} : vector<32x32xf32>, vector<32x8xf32>, vector<32x8xf32> -> vector<32x8xf32>
    %142 = vector.extract_strided_slice %97 {offsets = [32, 0], sizes = [32, 1], strides = [1, 1]} : vector<64x1xf32> to vector<32x1xf32>
    %143 = vector.broadcast %142 : vector<32x1xf32> to vector<32x8xf32>
    %144 = arith.addf %141, %143 : vector<32x8xf32>
    %cst_60 = arith.constant 0.000000e+00 : f32
    %145 = vector.broadcast %cst_60 : f32 to vector<32x8xf32>
    %146 = arith.cmpf oge, %144, %145 : vector<32x8xf32>
    %cst_61 = arith.constant 0.00999999977 : f32
    %147 = vector.broadcast %cst_61 : f32 to vector<32x8xf32>
    %148 = arith.mulf %147, %144 : vector<32x8xf32>
    %149 = arith.select %146, %144, %148 : vector<32x8xi1>, vector<32x8xf32>
    %150 = vector.extract_strided_slice %100 {offsets = [32, 0], sizes = [32, 1], strides = [1, 1]} : vector<64x1xf32> to vector<32x1xf32>
    %151 = vector.extract_strided_slice %103 {offsets = [32, 0], sizes = [32, 1], strides = [1, 1]} : vector<64x1xf32> to vector<32x1xf32>
    %cst_62 = arith.constant dense<0.000000e+00> : vector<8xf32>
    %152 = vector.multi_reduction <add>, %149, %cst_62 [0] : vector<32x8xf32> to vector<8xf32>
    %153 = vector.shape_cast %152 : vector<8xf32> to vector<1x8xf32>
    %cst_63 = arith.constant 3.200000e+01 : f32
    %154 = vector.broadcast %cst_63 : f32 to vector<1x8xf32>
    %155 = arith.divf %153, %154 : vector<1x8xf32>
    %156 = vector.broadcast %155 : vector<1x8xf32> to vector<32x8xf32>
    %157 = arith.subf %149, %156 : vector<32x8xf32>
    %158 = arith.mulf %157, %157 : vector<32x8xf32>
    %cst_64 = arith.constant dense<0.000000e+00> : vector<8xf32>
    %159 = vector.multi_reduction <add>, %158, %cst_64 [0] : vector<32x8xf32> to vector<8xf32>
    %160 = vector.shape_cast %159 : vector<8xf32> to vector<1x8xf32>
    %cst_65 = arith.constant 3.200000e+01 : f32
    %161 = vector.broadcast %cst_65 : f32 to vector<1x8xf32>
    %162 = arith.divf %160, %161 : vector<1x8xf32>
    %cst_66 = arith.constant 9.99999974E-6 : f32
    %163 = vector.broadcast %cst_66 : f32 to vector<1x8xf32>
    %164 = arith.addf %162, %163 : vector<1x8xf32>
    %165 = math.rsqrt %164 : vector<1x8xf32>
    %166 = vector.broadcast %165 : vector<1x8xf32> to vector<32x8xf32>
    %167 = arith.mulf %157, %166 : vector<32x8xf32>
    %168 = vector.broadcast %150 : vector<32x1xf32> to vector<32x8xf32>
    %169 = arith.mulf %167, %168 : vector<32x8xf32>
    %170 = vector.broadcast %151 : vector<32x1xf32> to vector<32x8xf32>
    %171 = arith.addf %169, %170 : vector<32x8xf32>
    %172 = arith.index_cast %arg1 : i32 to index
    %c0_67 = arith.constant 0 : index
    %c0_68 = arith.constant 0 : index
    %173 = vector.load %arg19[%172, %c0_67, %c0_68] : memref<2x2x32xf32, #tpu.memory_space<vmem>>, vector<1x2x32xf32>
    %174 = vector.shape_cast %173 : vector<1x2x32xf32> to vector<2x32xf32>
    %cst_69 = arith.constant dense<0.000000e+00> : vector<2x8xf32>
    %175 = tpu.matmul %174, %137, %cst_69 {dimension_numbers = #tpu.dot_dimension_numbers<[1], [0], [0], [1], [0, 0, 1, 1], [], []>} : vector<2x32xf32>, vector<32x8xf32>, vector<2x8xf32> -> vector<2x8xf32>
    %176 = arith.index_cast %arg1 : i32 to index
    %c0_70 = arith.constant 0 : index
    %c0_71 = arith.constant 0 : index
    %177 = vector.load %arg21[%176, %c0_70, %c0_71] : memref<2x2x1xf32, #tpu.memory_space<vmem>>, vector<1x2x1xf32>
    %178 = vector.shape_cast %177 : vector<1x2x1xf32> to vector<2x1xf32>
    %179 = vector.broadcast %178 : vector<2x1xf32> to vector<2x8xf32>
    %180 = arith.addf %175, %179 : vector<2x8xf32>
    %181 = arith.index_cast %arg1 : i32 to index
    %c0_72 = arith.constant 0 : index
    %c0_73 = arith.constant 0 : index
    %182 = vector.load %arg20[%181, %c0_72, %c0_73] : memref<2x2x32xf32, #tpu.memory_space<vmem>>, vector<1x2x32xf32>
    %183 = vector.shape_cast %182 : vector<1x2x32xf32> to vector<2x32xf32>
    %cst_74 = arith.constant dense<0.000000e+00> : vector<2x8xf32>
    %184 = tpu.matmul %183, %171, %cst_74 {dimension_numbers = #tpu.dot_dimension_numbers<[1], [0], [0], [1], [0, 0, 1, 1], [], []>} : vector<2x32xf32>, vector<32x8xf32>, vector<2x8xf32> -> vector<2x8xf32>
    %185 = arith.index_cast %arg1 : i32 to index
    %c0_75 = arith.constant 0 : index
    %c0_76 = arith.constant 0 : index
    %186 = vector.load %arg22[%185, %c0_75, %c0_76] : memref<2x2x1xf32, #tpu.memory_space<vmem>>, vector<1x2x1xf32>
    %187 = vector.shape_cast %186 : vector<1x2x1xf32> to vector<2x1xf32>
    %188 = vector.broadcast %187 : vector<2x1xf32> to vector<2x8xf32>
    %189 = arith.addf %184, %188 : vector<2x8xf32>
    %190 = arith.subf %22, %189 : vector<2x8xf32>
    %cst_77 = arith.constant 0.000000e+00 : f32
    %191 = vector.broadcast %cst_77 : f32 to vector<2x8xf32>
    %192 = arith.subf %191, %180 : vector<2x8xf32>
    %193 = math.exp %192 : vector<2x8xf32>
    %194 = arith.mulf %190, %193 : vector<2x8xf32>
    %c0_78 = arith.constant 0 : index
    %c0_79 = arith.constant 0 : index
    %195 = vector.load %arg26[%c0_78, %c0_79] : memref<2x8xf32, #tpu.memory_space<vmem>>, vector<2x8xf32>
    tpu.vector_store %arg26[%c0_78, %c0_79], %13 {strides = array<i32>} : memref<2x8xf32, #tpu.memory_space<vmem>>, vector<2x8xf32>,
    %c0_80 = arith.constant 0 : index
    %c0_81 = arith.constant 0 : index
    %196 = vector.load %arg27[%c0_80, %c0_81] : memref<2x8xf32, #tpu.memory_space<vmem>>, vector<2x8xf32>
    tpu.vector_store %arg27[%c0_80, %c0_81], %194 {strides = array<i32>} : memref<2x8xf32, #tpu.memory_space<vmem>>, vector<2x8xf32>,
    %c0_82 = arith.constant 0 : index
    %c0_83 = arith.constant 0 : index
    %c0_84 = arith.constant 0 : index
    %197 = vector.load %arg23[%c0_82, %c0_83, %c0_84] : memref<1x2x8xf32, #tpu.memory_space<vmem>>, vector<1x2x8xf32>
    %198 = vector.shape_cast %197 : vector<1x2x8xf32> to vector<2x8xf32>
    %199 = vector.shape_cast %13 : vector<2x8xf32> to vector<1x2x8xf32>
    tpu.vector_store %arg23[%c0_82, %c0_83, %c0_84], %199 {strides = array<i32>} : memref<1x2x8xf32, #tpu.memory_space<vmem>>, vector<1x2x8xf32>,
    %c0_85 = arith.constant 0 : index
    %c0_86 = arith.constant 0 : index
    %c0_87 = arith.constant 0 : index
    %200 = vector.load %arg24[%c0_85, %c0_86, %c0_87] : memref<1x2x8xf32, #tpu.memory_space<vmem>>, vector<1x2x8xf32>
    %201 = vector.shape_cast %200 : vector<1x2x8xf32> to vector<2x8xf32>
    %202 = vector.shape_cast %194 : vector<2x8xf32> to vector<1x2x8xf32>
    tpu.vector_store %arg24[%c0_85, %c0_86, %c0_87], %202 {strides = array<i32>} : memref<1x2x8xf32, #tpu.memory_space<vmem>>, vector<1x2x8xf32>,
    %c0_88 = arith.constant 0 : index
    %c0_89 = arith.constant 0 : index
    %203 = vector.load %arg25[%c0_88, %c0_89] : memref<1x8xf32, #tpu.memory_space<vmem>>, vector<1x8xf32>
    %cst_90 = arith.constant dense<0.000000e+00> : vector<8xf32>
    %204 = vector.multi_reduction <add>, %180, %cst_90 [0] : vector<2x8xf32> to vector<8xf32>
    %205 = vector.shape_cast %204 : vector<8xf32> to vector<1x8xf32>
    %206 = arith.subf %203, %205 : vector<1x8xf32>
    %c0_91 = arith.constant 0 : index
    %c0_92 = arith.constant 0 : index
    %207 = vector.load %arg25[%c0_91, %c0_92] : memref<1x8xf32, #tpu.memory_space<vmem>>, vector<1x8xf32>
    tpu.vector_store %arg25[%c0_91, %c0_92], %206 {strides = array<i32>} : memref<1x8xf32, #tpu.memory_space<vmem>>, vector<1x8xf32>,
    return
  }
  func.func @transform_0(%arg0: i32, %arg1: i32) -> (i32, i32) {
    %c0_i32 = arith.constant 0 : i32
    %c0_i32_0 = arith.constant 0 : i32
    return %c0_i32, %arg0 : i32, i32
  }
  func.func @transform_1(%arg0: i32, %arg1: i32) -> (i32, i32) {
    %c0_i32 = arith.constant 0 : i32
    %c0_i32_0 = arith.constant 0 : i32
    return %c0_i32, %arg0 : i32, i32
  }
  func.func @transform_2(%arg0: i32, %arg1: i32) -> (i32, i32) {
    %c0_i32 = arith.constant 0 : i32
    %c0_i32_0 = arith.constant 0 : i32
    return %c0_i32, %arg0 : i32, i32
  }
  func.func @transform_3(%arg0: i32, %arg1: i32) -> (i32, i32, i32) {
    %c0_i32 = arith.constant 0 : i32
    %c0_i32_0 = arith.constant 0 : i32
    %c0_i32_1 = arith.constant 0 : i32
    %c0_i32_2 = arith.constant 0 : i32
    return %c0_i32, %c0_i32_0, %c0_i32_1 : i32, i32, i32
  }
  func.func @transform_4(%arg0: i32, %arg1: i32) -> (i32, i32, i32) {
    %c0_i32 = arith.constant 0 : i32
    %c0_i32_0 = arith.constant 0 : i32
    %c0_i32_1 = arith.constant 0 : i32
    %c0_i32_2 = arith.constant 0 : i32
    return %c0_i32, %c0_i32_0, %c0_i32_1 : i32, i32, i32
  }
  func.func @transform_5(%arg0: i32, %arg1: i32) -> (i32, i32, i32) {
    %c0_i32 = arith.constant 0 : i32
    %c0_i32_0 = arith.constant 0 : i32
    %c0_i32_1 = arith.constant 0 : i32
    %c0_i32_2 = arith.constant 0 : i32
    return %c0_i32, %c0_i32_0, %c0_i32_1 : i32, i32, i32
  }
  func.func @transform_6(%arg0: i32, %arg1: i32) -> (i32, i32, i32) {
    %c0_i32 = arith.constant 0 : i32
    %c0_i32_0 = arith.constant 0 : i32
    %c0_i32_1 = arith.constant 0 : i32
    %c0_i32_2 = arith.constant 0 : i32
    return %c0_i32, %c0_i32_0, %c0_i32_1 : i32, i32, i32
  }
  func.func @transform_7(%arg0: i32, %arg1: i32) -> (i32, i32, i32) {
    %c0_i32 = arith.constant 0 : i32
    %c0_i32_0 = arith.constant 0 : i32
    %c0_i32_1 = arith.constant 0 : i32
    %c0_i32_2 = arith.constant 0 : i32
    return %c0_i32, %c0_i32_0, %c0_i32_1 : i32, i32, i32
  }
  func.func @transform_8(%arg0: i32, %arg1: i32) -> (i32, i32, i32) {
    %c0_i32 = arith.constant 0 : i32
    %c0_i32_0 = arith.constant 0 : i32
    %c0_i32_1 = arith.constant 0 : i32
    %c0_i32_2 = arith.constant 0 : i32
    return %c0_i32, %c0_i32_0, %c0_i32_1 : i32, i32, i32
  }
  func.func @transform_9(%arg0: i32, %arg1: i32) -> (i32, i32, i32) {
    %c0_i32 = arith.constant 0 : i32
    %c0_i32_0 = arith.constant 0 : i32
    %c0_i32_1 = arith.constant 0 : i32
    %c0_i32_2 = arith.constant 0 : i32
    return %c0_i32, %c0_i32_0, %c0_i32_1 : i32, i32, i32
  }
  func.func @transform_10(%arg0: i32, %arg1: i32) -> (i32, i32, i32) {
    %c0_i32 = arith.constant 0 : i32
    %c0_i32_0 = arith.constant 0 : i32
    %c0_i32_1 = arith.constant 0 : i32
    %c0_i32_2 = arith.constant 0 : i32
    return %c0_i32, %c0_i32_0, %c0_i32_1 : i32, i32, i32
  }
  func.func @transform_11(%arg0: i32, %arg1: i32) -> (i32, i32, i32) {
    %c0_i32 = arith.constant 0 : i32
    %c0_i32_0 = arith.constant 0 : i32
    %c0_i32_1 = arith.constant 0 : i32
    %c0_i32_2 = arith.constant 0 : i32
    return %c0_i32, %c0_i32_0, %c0_i32_1 : i32, i32, i32
  }
  func.func @transform_12(%arg0: i32, %arg1: i32) -> (i32, i32, i32) {
    %c0_i32 = arith.constant 0 : i32
    %c0_i32_0 = arith.constant 0 : i32
    %c0_i32_1 = arith.constant 0 : i32
    %c0_i32_2 = arith.constant 0 : i32
    return %c0_i32, %c0_i32_0, %c0_i32_1 : i32, i32, i32
  }
  func.func @transform_13(%arg0: i32, %arg1: i32) -> (i32, i32, i32) {
    %c0_i32 = arith.constant 0 : i32
    %c0_i32_0 = arith.constant 0 : i32
    %c0_i32_1 = arith.constant 0 : i32
    %c0_i32_2 = arith.constant 0 : i32
    return %c0_i32, %c0_i32_0, %c0_i32_1 : i32, i32, i32
  }
  func.func @transform_14(%arg0: i32, %arg1: i32) -> (i32, i32, i32) {
    %c0_i32 = arith.constant 0 : i32
    %c0_i32_0 = arith.constant 0 : i32
    %c0_i32_1 = arith.constant 0 : i32
    %c0_i32_2 = arith.constant 0 : i32
    return %c0_i32, %c0_i32_0, %c0_i32_1 : i32, i32, i32
  }
  func.func @transform_15(%arg0: i32, %arg1: i32) -> (i32, i32, i32) {
    %c0_i32 = arith.constant 0 : i32
    %c0_i32_0 = arith.constant 0 : i32
    %c0_i32_1 = arith.constant 0 : i32
    %c0_i32_2 = arith.constant 0 : i32
    return %c0_i32, %c0_i32_0, %c0_i32_1 : i32, i32, i32
  }
  func.func @transform_16(%arg0: i32, %arg1: i32) -> (i32, i32, i32) {
    %c0_i32 = arith.constant 0 : i32
    %c0_i32_0 = arith.constant 0 : i32
    %c0_i32_1 = arith.constant 0 : i32
    %c0_i32_2 = arith.constant 0 : i32
    return %c0_i32, %c0_i32_0, %c0_i32_1 : i32, i32, i32
  }
  func.func @transform_17(%arg0: i32, %arg1: i32) -> (i32, i32, i32) {
    %c0_i32 = arith.constant 0 : i32
    %c0_i32_0 = arith.constant 0 : i32
    %c0_i32_1 = arith.constant 0 : i32
    %c0_i32_2 = arith.constant 0 : i32
    return %c0_i32, %c0_i32_0, %c0_i32_1 : i32, i32, i32
  }
  func.func @transform_18(%arg0: i32, %arg1: i32) -> (i32, i32, i32) {
    %c0_i32 = arith.constant 0 : i32
    %c0_i32_0 = arith.constant 0 : i32
    %c0_i32_1 = arith.constant 0 : i32
    %c0_i32_2 = arith.constant 0 : i32
    return %c0_i32, %c0_i32_0, %c0_i32_1 : i32, i32, i32
  }
  func.func @transform_19(%arg0: i32, %arg1: i32) -> (i32, i32, i32) {
    %c0_i32 = arith.constant 0 : i32
    %c0_i32_0 = arith.constant 0 : i32
    %c0_i32_1 = arith.constant 0 : i32
    %c0_i32_2 = arith.constant 0 : i32
    return %c0_i32, %c0_i32_0, %c0_i32_1 : i32, i32, i32
  }
  func.func @transform_20(%arg0: i32, %arg1: i32) -> (i32, i32, i32) {
    %c0_i32 = arith.constant 0 : i32
    %c0_i32_0 = arith.constant 0 : i32
    %c0_i32_1 = arith.constant 0 : i32
    %c0_i32_2 = arith.constant 0 : i32
    return %c0_i32, %c0_i32_0, %c0_i32_1 : i32, i32, i32
  }
  func.func @transform_21(%arg0: i32, %arg1: i32) -> (i32, i32, i32) {
    %c0_i32 = arith.constant 0 : i32
    %c0_i32_0 = arith.constant 0 : i32
    return %arg1, %c0_i32, %arg0 : i32, i32, i32
  }
  func.func @transform_22(%arg0: i32, %arg1: i32) -> (i32, i32, i32) {
    %c0_i32 = arith.constant 0 : i32
    %c0_i32_0 = arith.constant 0 : i32
    return %arg1, %c0_i32, %arg0 : i32, i32, i32
  }
  func.func @transform_23(%arg0: i32, %arg1: i32) -> (i32, i32) {
    %c0_i32 = arith.constant 0 : i32
    %c0_i32_0 = arith.constant 0 : i32
    return %c0_i32, %arg0 : i32, i32
  }
}

</mosaic_0001>

<llo_original>
// kernel: _lambda_.1
$region0: #{_lambda_.1}
  #allocation0 [shape = 'u32[]', space=smem, size = 0x4, offset = 0x4, fixed_abs, tag = 'smem constant byte address 0x4 - core index']
  #allocation1 [shape = 'u32[144,128]{1,0:T(1,128)}', space=vmem, size = 0x12000, scoped, tag = 'internal scratch']
  #allocation2 [shape = 'f32[2,8]{1,0:T(2,128)}', space=vmem, size = 0x400, scoped, tag = 'scratch operand']
  #allocation3 [shape = 'f32[2,8]{1,0:T(2,128)}', space=vmem, size = 0x400, scoped, tag = 'scratch operand']
  %s0 = inlined_call_operand.vmem [shape: f32[2,8], index: 0, kind: input, shape index: {}]
  %s1 = inlined_call_operand.vmem [shape: f32[2,8], index: 1, kind: input, shape index: {}]
  %s2 = inlined_call_operand.vmem [shape: f32[4,8], index: 2, kind: input, shape index: {}]
  %s3 = inlined_call_operand.vmem [shape: f32[2,2,2], index: 3, kind: input, shape index: {}]
  %s4 = inlined_call_operand.vmem [shape: f32[2,2,2], index: 4, kind: input, shape index: {}]
  %s5 = inlined_call_operand.vmem [shape: f32[2,2,2], index: 5, kind: input, shape index: {}]
  %s6 = inlined_call_operand.vmem [shape: f32[2,2,2], index: 6, kind: input, shape index: {}]
  %s7 = inlined_call_operand.vmem [shape: f32[2,64,2], index: 7, kind: input, shape index: {}]
  %s8 = inlined_call_operand.vmem [shape: f32[2,64,4], index: 8, kind: input, shape index: {}]
  %s9 = inlined_call_operand.vmem [shape: f32[2,64,1], index: 9, kind: input, shape index: {}]
  %s10 = inlined_call_operand.vmem [shape: f32[2,64,1], index: 10, kind: input, shape index: {}]
  %s11 = inlined_call_operand.vmem [shape: f32[2,64,1], index: 11, kind: input, shape index: {}]
  %s12 = inlined_call_operand.vmem [shape: f32[2,32,32], index: 12, kind: input, shape index: {}]
  %s13 = inlined_call_operand.vmem [shape: f32[2,32,32], index: 13, kind: input, shape index: {}]
  %s14 = inlined_call_operand.vmem [shape: f32[2,64,1], index: 14, kind: input, shape index: {}]
  %s15 = inlined_call_operand.vmem [shape: f32[2,64,1], index: 15, kind: input, shape index: {}]
  %s16 = inlined_call_operand.vmem [shape: f32[2,64,1], index: 16, kind: input, shape index: {}]
  %s17 = inlined_call_operand.vmem [shape: f32[2,2,32], index: 17, kind: input, shape index: {}]
  %s18 = inlined_call_operand.vmem [shape: f32[2,2,32], index: 18, kind: input, shape index: {}]
  %s19 = inlined_call_operand.vmem [shape: f32[2,2,1], index: 19, kind: input, shape index: {}]
  %s20 = inlined_call_operand.vmem [shape: f32[2,2,1], index: 20, kind: input, shape index: {}]
  %s21 = inlined_call_operand.vmem [shape: f32[2,2,8], index: 21, kind: output, shape index: {0}]
  %s22 = inlined_call_operand.vmem [shape: f32[2,2,8], index: 22, kind: output, shape index: {1}]
  %s23 = inlined_call_operand.vmem [shape: f32[1,8], index: 23, kind: output, shape index: {2}]
  %24 = xla_tuple %s21, %s22, %s23
  %s25 = sld [smem:[#allocation0]]
  $region137: #{_lambda_.1} parent=0
    _
  %s27 = ssub.s32 1, %s25
  %s28 = scalar_select 0, %s27, %s25
  loop: start=0, step=1, limit=4
  $region2: #{_lambda_.1} parent=0 // loop_pre_header
    _
  $region3: #{_lambda_.1} parent=0 // loop_header
    %s30 = sphi 0, %s34
    %p31 = scmp.ge.s32.totalorder %s30, 4
    %s37 = sphi 0, %s49
    %s38 = sphi 0, %s45
    %s39 = sphi 0, %s37
    %s40 = sphi 0, %s38
    %s41 = sphi 0, %s39
    %s42 = sphi 0, %s40
    %s52 = sphi 0, %s54
    %s55 = sphi 0, %s52
    %s56 = sphi 0, %s55
    %s72 = sphi 0, %s56
    %s78 = sphi 0, %s80
    %s81 = sphi 0, %s78
    %s82 = sphi 0, %s81
    %s98 = sphi 0, %s82
    %s104 = sphi 0, %s106
    %s107 = sphi 0, %s104
    %s108 = sphi 0, %s107
    %s124 = sphi 0, %s108
    %s128 = sphi 0, %s128
    %s130 = sphi 0, %s128
    %s131 = sphi 0, %s130
    %s145 = sphi 0, %s131
    %s149 = sphi 0, %s149
    %s151 = sphi 0, %s149
    %s152 = sphi 0, %s151
    %s166 = sphi 0, %s152
    %s170 = sphi 0, %s170
    %s172 = sphi 0, %s170
    %s173 = sphi 0, %s172
    %s187 = sphi 0, %s173
    %s191 = sphi 0, %s191
    %s193 = sphi 0, %s191
    %s194 = sphi 0, %s193
    %s208 = sphi 0, %s194
    %s212 = sphi 0, %s212
    %s214 = sphi 0, %s212
    %s215 = sphi 0, %s214
    %s229 = sphi 0, %s215
    %s233 = sphi 0, %s233
    %s235 = sphi 0, %s233
    %s236 = sphi 0, %s235
    %s250 = sphi 0, %s236
    %s254 = sphi 0, %s254
    %s256 = sphi 0, %s254
    %s257 = sphi 0, %s256
    %s271 = sphi 0, %s257
    %s275 = sphi 0, %s275
    %s277 = sphi 0, %s275
    %s278 = sphi 0, %s277
    %s292 = sphi 0, %s278
    %s296 = sphi 0, %s296
    %s298 = sphi 0, %s296
    %s299 = sphi 0, %s298
    %s313 = sphi 0, %s299
    %s317 = sphi 0, %s317
    %s319 = sphi 0, %s317
    %s320 = sphi 0, %s319
    %s334 = sphi 0, %s320
    %s338 = sphi 0, %s338
    %s340 = sphi 0, %s338
    %s341 = sphi 0, %s340
    %s355 = sphi 0, %s341
    %s359 = sphi 0, %s359
    %s361 = sphi 0, %s359
    %s362 = sphi 0, %s361
    %s376 = sphi 0, %s362
    %s380 = sphi 0, %s380
    %s382 = sphi 0, %s380
    %s383 = sphi 0, %s382
    %s397 = sphi 0, %s383
    %s401 = sphi 0, %s401
    %s403 = sphi 0, %s401
    %s404 = sphi 0, %s403
    %s418 = sphi 0, %s404
    %s422 = sphi 0, %s422
    %s424 = sphi 0, %s422
    %s425 = sphi 0, %s424
    %s439 = sphi 0, %s425
    %s443 = sphi 0, %s443
    %s445 = sphi 0, %s443
    %s446 = sphi 0, %s445
    %s460 = sphi 0, %s446
    %s464 = sphi 0, %s464
    %s466 = sphi 0, %s464
    %s467 = sphi 0, %s466
    %s481 = sphi 0, %s467
    %s485 = sphi 0, %s485
    %s487 = sphi 0, %s485
    %s488 = sphi 0, %s487
    %s502 = sphi 0, %s488
    %s510 = sphi 0, %s512
    %s513 = sphi 0, %s510
    %s514 = sphi 0, %s513
    %s530 = sphi 0, %s514
    %s538 = sphi 0, %s540
    %s541 = sphi 0, %s538
    %s542 = sphi 0, %s541
    %s558 = sphi 0, %s542
    %s564 = sphi 0, %s566
    %s567 = sphi 0, %s564
    %s568 = sphi 0, %s567
    %s584 = sphi 0, %s568
  $region4: #{_lambda_.1} parent=0 // loop_header_branch
    %33 = sbr.rel (%p31) target = $region8
  $region5: #{_lambda_.1} parent=0 // loop_body
    %s35 = ssub.s32 %s30, 1
    %s36 = ssub.s32 %s30, 2
    %s43 = sadd.s32 1, %s38
    %p44 = scmp.ge.s32.totalorder %s43, 2
    %s45 = scalar_select %p44, 0, %s43
    %s46 = sadd.s32 1, %s37
    %s47 = scalar_select %p44, %s46, %s37
    %p48 = scmp.ge.s32.totalorder %s47, 1
    %s49 = scalar_select %p48, 0, %s47
    %s50 = ssub.s32 %s37, %s49
    %p51 = scmp.eq.s32.totalorder %s50, 0
    %s53 = sadd.s32 %s52, 1
    %s54 = scalar_select %p51, %s52, %s53
    %p57 = pneg %p51
    %p58 = scmp.eq.s32.totalorder %s30, 1
    %p59 = por %p57, %p58
    %p60 = scmp.ne.s32.totalorder %s52, %s55
    %p61 = scmp.eq.s32.totalorder %s30, 0
    %p62 = por %p60, %p61
    %p63 = scmp.ne.s32.totalorder %s52, %s55
    %p64 = scmp.eq.s32.totalorder %s35, 1
    %p65 = por %p63, %p64
    %p66 = scmp.ne.s32.totalorder %s55, %s56
    %p67 = scmp.eq.s32.totalorder %s35, 0
    %p68 = por %p66, %p67
    %p69 = scmp.ne.s32.totalorder %s55, %s56
    %p70 = scmp.eq.s32.totalorder %s36, 1
    %p71 = por %p69, %p70
    %p73 = scmp.ne.s32.totalorder %s56, %s72
    %p74 = scmp.eq.s32.totalorder %s36, 0
    %p75 = por %p73, %p74
    %s76 = ssub.s32 %s37, %s49
    %p77 = scmp.eq.s32.totalorder %s76, 0
    %s79 = sadd.s32 %s78, 1
    %s80 = scalar_select %p77, %s78, %s79
    %p83 = pneg %p77
    %p84 = scmp.eq.s32.totalorder %s30, 1
    %p85 = por %p83, %p84
    %p86 = scmp.ne.s32.totalorder %s78, %s81
    %p87 = scmp.eq.s32.totalorder %s30, 0
    %p88 = por %p86, %p87
    %p89 = scmp.ne.s32.totalorder %s78, %s81
    %p90 = scmp.eq.s32.totalorder %s35, 1
    %p91 = por %p89, %p90
    %p92 = scmp.ne.s32.totalorder %s81, %s82
    %p93 = scmp.eq.s32.totalorder %s35, 0
    %p94 = por %p92, %p93
    %p95 = scmp.ne.s32.totalorder %s81, %s82
    %p96 = scmp.eq.s32.totalorder %s36, 1
    %p97 = por %p95, %p96
    %p99 = scmp.ne.s32.totalorder %s82, %s98
    %p100 = scmp.eq.s32.totalorder %s36, 0
    %p101 = por %p99, %p100
    %s102 = ssub.s32 %s37, %s49
    %p103 = scmp.eq.s32.totalorder %s102, 0
    %s105 = sadd.s32 %s104, 1
    %s106 = scalar_select %p103, %s104, %s105
    %p109 = pneg %p103
    %p110 = scmp.eq.s32.totalorder %s30, 1
    %p111 = por %p109, %p110
    %p112 = scmp.ne.s32.totalorder %s104, %s107
    %p113 = scmp.eq.s32.totalorder %s30, 0
    %p114 = por %p112, %p113
    %p115 = scmp.ne.s32.totalorder %s104, %s107
    %p116 = scmp.eq.s32.totalorder %s35, 1
    %p117 = por %p115, %p116
    %p118 = scmp.ne.s32.totalorder %s107, %s108
    %p119 = scmp.eq.s32.totalorder %s35, 0
    %p120 = por %p118, %p119
    %p121 = scmp.ne.s32.totalorder %s107, %s108
    %p122 = scmp.eq.s32.totalorder %s36, 1
    %p123 = por %p121, %p122
    %p125 = scmp.ne.s32.totalorder %s108, %s124
    %p126 = scmp.eq.s32.totalorder %s36, 0
    %p127 = por %p125, %p126
    %s129 = sadd.s32 %s128, 1
    %p132 = scmp.eq.s32.totalorder %s30, 1
    %p133 = scmp.ne.s32.totalorder %s128, %s130
    %p134 = scmp.eq.s32.totalorder %s30, 0
    %p135 = por %p133, %p134
    %p136 = scmp.ne.s32.totalorder %s128, %s130
    %p137 = scmp.eq.s32.totalorder %s35, 1
    %p138 = por %p136, %p137
    %p139 = scmp.ne.s32.totalorder %s130, %s131
    %p140 = scmp.eq.s32.totalorder %s35, 0
    %p141 = por %p139, %p140
    %p142 = scmp.ne.s32.totalorder %s130, %s131
    %p143 = scmp.eq.s32.totalorder %s36, 1
    %p144 = por %p142, %p143
    %p146 = scmp.ne.s32.totalorder %s131, %s145
    %p147 = scmp.eq.s32.totalorder %s36, 0
    %p148 = por %p146, %p147
    %s150 = sadd.s32 %s149, 1
    %p153 = scmp.eq.s32.totalorder %s30, 1
    %p154 = scmp.ne.s32.totalorder %s149, %s151
    %p155 = scmp.eq.s32.totalorder %s30, 0
    %p156 = por %p154, %p155
    %p157 = scmp.ne.s32.totalorder %s149, %s151
    %p158 = scmp.eq.s32.totalorder %s35, 1
    %p159 = por %p157, %p158
    %p160 = scmp.ne.s32.totalorder %s151, %s152
    %p161 = scmp.eq.s32.totalorder %s35, 0
    %p162 = por %p160, %p161
    %p163 = scmp.ne.s32.totalorder %s151, %s152
    %p164 = scmp.eq.s32.totalorder %s36, 1
    %p165 = por %p163, %p164
    %p167 = scmp.ne.s32.totalorder %s152, %s166
    %p168 = scmp.eq.s32.totalorder %s36, 0
    %p169 = por %p167, %p168
    %s171 = sadd.s32 %s170, 1
    %p174 = scmp.eq.s32.totalorder %s30, 1
    %p175 = scmp.ne.s32.totalorder %s170, %s172
    %p176 = scmp.eq.s32.totalorder %s30, 0
    %p177 = por %p175, %p176
    %p178 = scmp.ne.s32.totalorder %s170, %s172
    %p179 = scmp.eq.s32.totalorder %s35, 1
    %p180 = por %p178, %p179
    %p181 = scmp.ne.s32.totalorder %s172, %s173
    %p182 = scmp.eq.s32.totalorder %s35, 0
    %p183 = por %p181, %p182
    %p184 = scmp.ne.s32.totalorder %s172, %s173
    %p185 = scmp.eq.s32.totalorder %s36, 1
    %p186 = por %p184, %p185
    %p188 = scmp.ne.s32.totalorder %s173, %s187
    %p189 = scmp.eq.s32.totalorder %s36, 0
    %p190 = por %p188, %p189
    %s192 = sadd.s32 %s191, 1
    %p195 = scmp.eq.s32.totalorder %s30, 1
    %p196 = scmp.ne.s32.totalorder %s191, %s193
    %p197 = scmp.eq.s32.totalorder %s30, 0
    %p198 = por %p196, %p197
    %p199 = scmp.ne.s32.totalorder %s191, %s193
    %p200 = scmp.eq.s32.totalorder %s35, 1
    %p201 = por %p199, %p200
    %p202 = scmp.ne.s32.totalorder %s193, %s194
    %p203 = scmp.eq.s32.totalorder %s35, 0
    %p204 = por %p202, %p203
    %p205 = scmp.ne.s32.totalorder %s193, %s194
    %p206 = scmp.eq.s32.totalorder %s36, 1
    %p207 = por %p205, %p206
    %p209 = scmp.ne.s32.totalorder %s194, %s208
    %p210 = scmp.eq.s32.totalorder %s36, 0
    %p211 = por %p209, %p210
    %s213 = sadd.s32 %s212, 1
    %p216 = scmp.eq.s32.totalorder %s30, 1
    %p217 = scmp.ne.s32.totalorder %s212, %s214
    %p218 = scmp.eq.s32.totalorder %s30, 0
    %p219 = por %p217, %p218
    %p220 = scmp.ne.s32.totalorder %s212, %s214
    %p221 = scmp.eq.s32.totalorder %s35, 1
    %p222 = por %p220, %p221
    %p223 = scmp.ne.s32.totalorder %s214, %s215
    %p224 = scmp.eq.s32.totalorder %s35, 0
    %p225 = por %p223, %p224
    %p226 = scmp.ne.s32.totalorder %s214, %s215
    %p227 = scmp.eq.s32.totalorder %s36, 1
    %p228 = por %p226, %p227
    %p230 = scmp.ne.s32.totalorder %s215, %s229
    %p231 = scmp.eq.s32.totalorder %s36, 0
    %p232 = por %p230, %p231
    %s234 = sadd.s32 %s233, 1
    %p237 = scmp.eq.s32.totalorder %s30, 1
    %p238 = scmp.ne.s32.totalorder %s233, %s235
    %p239 = scmp.eq.s32.totalorder %s30, 0
    %p240 = por %p238, %p239
    %p241 = scmp.ne.s32.totalorder %s233, %s235
    %p242 = scmp.eq.s32.totalorder %s35, 1
    %p243 = por %p241, %p242
    %p244 = scmp.ne.s32.totalorder %s235, %s236
    %p245 = scmp.eq.s32.totalorder %s35, 0
    %p246 = por %p244, %p245
    %p247 = scmp.ne.s32.totalorder %s235, %s236
    %p248 = scmp.eq.s32.totalorder %s36, 1
    %p249 = por %p247, %p248
    %p251 = scmp.ne.s32.totalorder %s236, %s250
    %p252 = scmp.eq.s32.totalorder %s36, 0
    %p253 = por %p251, %p252
    %s255 = sadd.s32 %s254, 1
    %p258 = scmp.eq.s32.totalorder %s30, 1
    %p259 = scmp.ne.s32.totalorder %s254, %s256
    %p260 = scmp.eq.s32.totalorder %s30, 0
    %p261 = por %p259, %p260
    %p262 = scmp.ne.s32.totalorder %s254, %s256
    %p263 = scmp.eq.s32.totalorder %s35, 1
    %p264 = por %p262, %p263
    %p265 = scmp.ne.s32.totalorder %s256, %s257
    %p266 = scmp.eq.s32.totalorder %s35, 0
    %p267 = por %p265, %p266
    %p268 = scmp.ne.s32.totalorder %s256, %s257
    %p269 = scmp.eq.s32.totalorder %s36, 1
    %p270 = por %p268, %p269
    %p272 = scmp.ne.s32.totalorder %s257, %s271
    %p273 = scmp.eq.s32.totalorder %s36, 0
    %p274 = por %p272, %p273
    %s276 = sadd.s32 %s275, 1
    %p279 = scmp.eq.s32.totalorder %s30, 1
    %p280 = scmp.ne.s32.totalorder %s275, %s277
    %p281 = scmp.eq.s32.totalorder %s30, 0
    %p282 = por %p280, %p281
    %p283 = scmp.ne.s32.totalorder %s275, %s277
    %p284 = scmp.eq.s32.totalorder %s35, 1
    %p285 = por %p283, %p284
    %p286 = scmp.ne.s32.totalorder %s277, %s278
    %p287 = scmp.eq.s32.totalorder %s35, 0
    %p288 = por %p286, %p287
    %p289 = scmp.ne.s32.totalorder %s277, %s278
    %p290 = scmp.eq.s32.totalorder %s36, 1
    %p291 = por %p289, %p290
    %p293 = scmp.ne.s32.totalorder %s278, %s292
    %p294 = scmp.eq.s32.totalorder %s36, 0
    %p295 = por %p293, %p294
    %s297 = sadd.s32 %s296, 1
    %p300 = scmp.eq.s32.totalorder %s30, 1
    %p301 = scmp.ne.s32.totalorder %s296, %s298
    %p302 = scmp.eq.s32.totalorder %s30, 0
    %p303 = por %p301, %p302
    %p304 = scmp.ne.s32.totalorder %s296, %s298
    %p305 = scmp.eq.s32.totalorder %s35, 1
    %p306 = por %p304, %p305
    %p307 = scmp.ne.s32.totalorder %s298, %s299
    %p308 = scmp.eq.s32.totalorder %s35, 0
    %p309 = por %p307, %p308
    %p310 = scmp.ne.s32.totalorder %s298, %s299
    %p311 = scmp.eq.s32.totalorder %s36, 1
    %p312 = por %p310, %p311
    %p314 = scmp.ne.s32.totalorder %s299, %s313
    %p315 = scmp.eq.s32.totalorder %s36, 0
    %p316 = por %p314, %p315
    %s318 = sadd.s32 %s317, 1
    %p321 = scmp.eq.s32.totalorder %s30, 1
    %p322 = scmp.ne.s32.totalorder %s317, %s319
    %p323 = scmp.eq.s32.totalorder %s30, 0
    %p324 = por %p322, %p323
    %p325 = scmp.ne.s32.totalorder %s317, %s319
    %p326 = scmp.eq.s32.totalorder %s35, 1
    %p327 = por %p325, %p326
    %p328 = scmp.ne.s32.totalorder %s319, %s320
    %p329 = scmp.eq.s32.totalorder %s35, 0
    %p330 = por %p328, %p329
    %p331 = scmp.ne.s32.totalorder %s319, %s320
    %p332 = scmp.eq.s32.totalorder %s36, 1
    %p333 = por %p331, %p332
    %p335 = scmp.ne.s32.totalorder %s320, %s334
    %p336 = scmp.eq.s32.totalorder %s36, 0
    %p337 = por %p335, %p336
    %s339 = sadd.s32 %s338, 1
    %p342 = scmp.eq.s32.totalorder %s30, 1
    %p343 = scmp.ne.s32.totalorder %s338, %s340
    %p344 = scmp.eq.s32.totalorder %s30, 0
    %p345 = por %p343, %p344
    %p346 = scmp.ne.s32.totalorder %s338, %s340
    %p347 = scmp.eq.s32.totalorder %s35, 1
    %p348 = por %p346, %p347
    %p349 = scmp.ne.s32.totalorder %s340, %s341
    %p350 = scmp.eq.s32.totalorder %s35, 0
    %p351 = por %p349, %p350
    %p352 = scmp.ne.s32.totalorder %s340, %s341
    %p353 = scmp.eq.s32.totalorder %s36, 1
    %p354 = por %p352, %p353
    %p356 = scmp.ne.s32.totalorder %s341, %s355
    %p357 = scmp.eq.s32.totalorder %s36, 0
    %p358 = por %p356, %p357
    %s360 = sadd.s32 %s359, 1
    %p363 = scmp.eq.s32.totalorder %s30, 1
    %p364 = scmp.ne.s32.totalorder %s359, %s361
    %p365 = scmp.eq.s32.totalorder %s30, 0
    %p366 = por %p364, %p365
    %p367 = scmp.ne.s32.totalorder %s359, %s361
    %p368 = scmp.eq.s32.totalorder %s35, 1
    %p369 = por %p367, %p368
    %p370 = scmp.ne.s32.totalorder %s361, %s362
    %p371 = scmp.eq.s32.totalorder %s35, 0
    %p372 = por %p370, %p371
    %p373 = scmp.ne.s32.totalorder %s361, %s362
    %p374 = scmp.eq.s32.totalorder %s36, 1
    %p375 = por %p373, %p374
    %p377 = scmp.ne.s32.totalorder %s362, %s376
    %p378 = scmp.eq.s32.totalorder %s36, 0
    %p379 = por %p377, %p378
    %s381 = sadd.s32 %s380, 1
    %p384 = scmp.eq.s32.totalorder %s30, 1
    %p385 = scmp.ne.s32.totalorder %s380, %s382
    %p386 = scmp.eq.s32.totalorder %s30, 0
    %p387 = por %p385, %p386
    %p388 = scmp.ne.s32.totalorder %s380, %s382
    %p389 = scmp.eq.s32.totalorder %s35, 1
    %p390 = por %p388, %p389
    %p391 = scmp.ne.s32.totalorder %s382, %s383
    %p392 = scmp.eq.s32.totalorder %s35, 0
    %p393 = por %p391, %p392
    %p394 = scmp.ne.s32.totalorder %s382, %s383
    %p395 = scmp.eq.s32.totalorder %s36, 1
    %p396 = por %p394, %p395
    %p398 = scmp.ne.s32.totalorder %s383, %s397
    %p399 = scmp.eq.s32.totalorder %s36, 0
    %p400 = por %p398, %p399
    %s402 = sadd.s32 %s401, 1
    %p405 = scmp.eq.s32.totalorder %s30, 1
    %p406 = scmp.ne.s32.totalorder %s401, %s403
    %p407 = scmp.eq.s32.totalorder %s30, 0
    %p408 = por %p406, %p407
    %p409 = scmp.ne.s32.totalorder %s401, %s403
    %p410 = scmp.eq.s32.totalorder %s35, 1
    %p411 = por %p409, %p410
    %p412 = scmp.ne.s32.totalorder %s403, %s404
    %p413 = scmp.eq.s32.totalorder %s35, 0
    %p414 = por %p412, %p413
    %p415 = scmp.ne.s32.totalorder %s403, %s404
    %p416 = scmp.eq.s32.totalorder %s36, 1
    %p417 = por %p415, %p416
    %p419 = scmp.ne.s32.totalorder %s404, %s418
    %p420 = scmp.eq.s32.totalorder %s36, 0
    %p421 = por %p419, %p420
    %s423 = sadd.s32 %s422, 1
    %p426 = scmp.eq.s32.totalorder %s30, 1
    %p427 = scmp.ne.s32.totalorder %s422, %s424
    %p428 = scmp.eq.s32.totalorder %s30, 0
    %p429 = por %p427, %p428
    %p430 = scmp.ne.s32.totalorder %s422, %s424
    %p431 = scmp.eq.s32.totalorder %s35, 1
    %p432 = por %p430, %p431
    %p433 = scmp.ne.s32.totalorder %s424, %s425
    %p434 = scmp.eq.s32.totalorder %s35, 0
    %p435 = por %p433, %p434
    %p436 = scmp.ne.s32.totalorder %s424, %s425
    %p437 = scmp.eq.s32.totalorder %s36, 1
    %p438 = por %p436, %p437
    %p440 = scmp.ne.s32.totalorder %s425, %s439
    %p441 = scmp.eq.s32.totalorder %s36, 0
    %p442 = por %p440, %p441
    %s444 = sadd.s32 %s443, 1
    %p447 = scmp.eq.s32.totalorder %s30, 1
    %p448 = scmp.ne.s32.totalorder %s443, %s445
    %p449 = scmp.eq.s32.totalorder %s30, 0
    %p450 = por %p448, %p449
    %p451 = scmp.ne.s32.totalorder %s443, %s445
    %p452 = scmp.eq.s32.totalorder %s35, 1
    %p453 = por %p451, %p452
    %p454 = scmp.ne.s32.totalorder %s445, %s446
    %p455 = scmp.eq.s32.totalorder %s35, 0
    %p456 = por %p454, %p455
    %p457 = scmp.ne.s32.totalorder %s445, %s446
    %p458 = scmp.eq.s32.totalorder %s36, 1
    %p459 = por %p457, %p458
    %p461 = scmp.ne.s32.totalorder %s446, %s460
    %p462 = scmp.eq.s32.totalorder %s36, 0
    %p463 = por %p461, %p462
    %s465 = sadd.s32 %s464, 1
    %p468 = scmp.eq.s32.totalorder %s30, 1
    %p469 = scmp.ne.s32.totalorder %s464, %s466
    %p470 = scmp.eq.s32.totalorder %s30, 0
    %p471 = por %p469, %p470
    %p472 = scmp.ne.s32.totalorder %s464, %s466
    %p473 = scmp.eq.s32.totalorder %s35, 1
    %p474 = por %p472, %p473
    %p475 = scmp.ne.s32.totalorder %s466, %s467
    %p476 = scmp.eq.s32.totalorder %s35, 0
    %p477 = por %p475, %p476
    %p478 = scmp.ne.s32.totalorder %s466, %s467
    %p479 = scmp.eq.s32.totalorder %s36, 1
    %p480 = por %p478, %p479
    %p482 = scmp.ne.s32.totalorder %s467, %s481
    %p483 = scmp.eq.s32.totalorder %s36, 0
    %p484 = por %p482, %p483
    %s486 = sadd.s32 %s485, 1
    %p489 = scmp.eq.s32.totalorder %s30, 1
    %p490 = scmp.ne.s32.totalorder %s485, %s487
    %p491 = scmp.eq.s32.totalorder %s30, 0
    %p492 = por %p490, %p491
    %p493 = scmp.ne.s32.totalorder %s485, %s487
    %p494 = scmp.eq.s32.totalorder %s35, 1
    %p495 = por %p493, %p494
    %p496 = scmp.ne.s32.totalorder %s487, %s488
    %p497 = scmp.eq.s32.totalorder %s35, 0
    %p498 = por %p496, %p497
    %p499 = scmp.ne.s32.totalorder %s487, %s488
    %p500 = scmp.eq.s32.totalorder %s36, 1
    %p501 = por %p499, %p500
    %p503 = scmp.ne.s32.totalorder %s488, %s502
    %p504 = scmp.eq.s32.totalorder %s36, 0
    %p505 = por %p503, %p504
    %s506 = ssub.s32 %s38, %s45
    %s507 = ssub.s32 %s37, %s49
    %s508 = sor.u32 %s506, %s507
    %p509 = scmp.eq.s32.totalorder %s508, 0
    %s511 = sadd.s32 %s510, 1
    %s512 = scalar_select %p509, %s510, %s511
    %p515 = pneg %p509
    %p516 = scmp.eq.s32.totalorder %s30, 1
    %p517 = por %p515, %p516
    %p518 = scmp.ne.s32.totalorder %s510, %s513
    %p519 = scmp.eq.s32.totalorder %s30, 0
    %p520 = por %p518, %p519
    %p521 = scmp.ne.s32.totalorder %s510, %s513
    %p522 = scmp.eq.s32.totalorder %s35, 1
    %p523 = por %p521, %p522
    %p524 = scmp.ne.s32.totalorder %s513, %s514
    %p525 = scmp.eq.s32.totalorder %s35, 0
    %p526 = por %p524, %p525
    %p527 = scmp.ne.s32.totalorder %s513, %s514
    %p528 = scmp.eq.s32.totalorder %s36, 1
    %p529 = por %p527, %p528
    %p531 = scmp.ne.s32.totalorder %s514, %s530
    %p532 = scmp.eq.s32.totalorder %s36, 0
    %p533 = por %p531, %p532
    %s534 = ssub.s32 %s38, %s45
    %s535 = ssub.s32 %s37, %s49
    %s536 = sor.u32 %s534, %s535
    %p537 = scmp.eq.s32.totalorder %s536, 0
    %s539 = sadd.s32 %s538, 1
    %s540 = scalar_select %p537, %s538, %s539
    %p543 = pneg %p537
    %p544 = scmp.eq.s32.totalorder %s30, 1
    %p545 = por %p543, %p544
    %p546 = scmp.ne.s32.totalorder %s538, %s541
    %p547 = scmp.eq.s32.totalorder %s30, 0
    %p548 = por %p546, %p547
    %p549 = scmp.ne.s32.totalorder %s538, %s541
    %p550 = scmp.eq.s32.totalorder %s35, 1
    %p551 = por %p549, %p550
    %p552 = scmp.ne.s32.totalorder %s541, %s542
    %p553 = scmp.eq.s32.totalorder %s35, 0
    %p554 = por %p552, %p553
    %p555 = scmp.ne.s32.totalorder %s541, %s542
    %p556 = scmp.eq.s32.totalorder %s36, 1
    %p557 = por %p555, %p556
    %p559 = scmp.ne.s32.totalorder %s542, %s558
    %p560 = scmp.eq.s32.totalorder %s36, 0
    %p561 = por %p559, %p560
    %s562 = ssub.s32 %s37, %s49
    %p563 = scmp.eq.s32.totalorder %s562, 0
    %s565 = sadd.s32 %s564, 1
    %s566 = scalar_select %p563, %s564, %s565
    %p569 = pneg %p563
    %p570 = scmp.eq.s32.totalorder %s30, 1
    %p571 = por %p569, %p570
    %p572 = scmp.ne.s32.totalorder %s564, %s567
    %p573 = scmp.eq.s32.totalorder %s30, 0
    %p574 = por %p572, %p573
    %p575 = scmp.ne.s32.totalorder %s564, %s567
    %p576 = scmp.eq.s32.totalorder %s35, 1
    %p577 = por %p575, %p576
    %p578 = scmp.ne.s32.totalorder %s567, %s568
    %p579 = scmp.eq.s32.totalorder %s35, 0
    %p580 = por %p578, %p579
    %p581 = scmp.ne.s32.totalorder %s567, %s568
    %p582 = scmp.eq.s32.totalorder %s36, 1
    %p583 = por %p581, %p582
    %p585 = scmp.ne.s32.totalorder %s568, %s584
    %p586 = scmp.eq.s32.totalorder %s36, 0
    %p587 = por %p585, %p586
    %p588 = scmp.le.s32.totalorder 1, %s30
    %p589 = scmp.lt.s32.totalorder %s30, 3
    %p590 = pnand %p588, %p589
    %p591 = pneg %p590
    // Predicated region
    $region9: #{_lambda_.1} parent=5 // pred_check
      _
    $region10: #{_lambda_.1} parent=5 // pred_check_branch
      %593 = sbr.rel (%p590) target = $region12
    $region11: #{_lambda_.1} parent=5 // pred_region
      %s594 = ssub.s32 %s30, 1
      // Predicated region
      $region13: #{_lambda_.1} parent=11 // pred_check
        %p595 = pneg %p68
      $region14: #{_lambda_.1} parent=11 // pred_check_branch
        %597 = sbr.rel (%p595) target = $region16
      $region15: #{_lambda_.1} parent=11 // pred_region
        %p598 = scmp.lt.s32.totalorder %s39, 0
        %s599 = scalar_select %p598, %s39, 0
        %s600 = smul.addr %s599, 2
        %s601 = scalar_lea.vmem %s0, %s600
      $region16: #{_lambda_.1} parent=11 // pred_fallthru
        _
      // Predicated region
      $region17: #{_lambda_.1} parent=11 // pred_check
        %p602 = pneg %p94
      $region18: #{_lambda_.1} parent=11 // pred_check_branch
        %604 = sbr.rel (%p602) target = $region20
      $region19: #{_lambda_.1} parent=11 // pred_region
        %p605 = scmp.lt.s32.totalorder %s39, 0
        %s606 = scalar_select %p605, %s39, 0
        %s607 = smul.addr %s606, 2
        %s608 = scalar_lea.vmem %s1, %s607
      $region20: #{_lambda_.1} parent=11 // pred_fallthru
        _
      // Predicated region
      $region21: #{_lambda_.1} parent=11 // pred_check
        %p609 = pneg %p120
      $region22: #{_lambda_.1} parent=11 // pred_check_branch
        %611 = sbr.rel (%p609) target = $region24
      $region23: #{_lambda_.1} parent=11 // pred_region
        %p612 = scmp.lt.s32.totalorder %s39, 0
        %s613 = scalar_select %p612, %s39, 0
        %s614 = smul.addr %s613, 4
        %s615 = scalar_lea.vmem %s2, %s614
      $region24: #{_lambda_.1} parent=11 // pred_fallthru
        _
      // Predicated region
      $region25: #{_lambda_.1} parent=11 // pred_check
        %p616 = pneg %p141
      $region26: #{_lambda_.1} parent=11 // pred_check_branch
        %618 = sbr.rel (%p616) target = $region28
      $region27: #{_lambda_.1} parent=11 // pred_region
        _
      $region28: #{_lambda_.1} parent=11 // pred_fallthru
        _
      // Predicated region
      $region29: #{_lambda_.1} parent=11 // pred_check
        %p619 = pneg %p162
      $region30: #{_lambda_.1} parent=11 // pred_check_branch
        %621 = sbr.rel (%p619) target = $region32
      $region31: #{_lambda_.1} parent=11 // pred_region
        _
      $region32: #{_lambda_.1} parent=11 // pred_fallthru
        _
      // Predicated region
      $region33: #{_lambda_.1} parent=11 // pred_check
        %p622 = pneg %p183
      $region34: #{_lambda_.1} parent=11 // pred_check_branch
        %624 = sbr.rel (%p622) target = $region36
      $region35: #{_lambda_.1} parent=11 // pred_region
        _
      $region36: #{_lambda_.1} parent=11 // pred_fallthru
        _
      // Predicated region
      $region37: #{_lambda_.1} parent=11 // pred_check
        %p625 = pneg %p204
      $region38: #{_lambda_.1} parent=11 // pred_check_branch
        %627 = sbr.rel (%p625) target = $region40
      $region39: #{_lambda_.1} parent=11 // pred_region
        _
      $region40: #{_lambda_.1} parent=11 // pred_fallthru
        _
      // Predicated region
      $region41: #{_lambda_.1} parent=11 // pred_check
        %p628 = pneg %p225
      $region42: #{_lambda_.1} parent=11 // pred_check_branch
        %630 = sbr.rel (%p628) target = $region44
      $region43: #{_lambda_.1} parent=11 // pred_region
        _
      $region44: #{_lambda_.1} parent=11 // pred_fallthru
        _
      // Predicated region
      $region45: #{_lambda_.1} parent=11 // pred_check
        %p631 = pneg %p246
      $region46: #{_lambda_.1} parent=11 // pred_check_branch
        %633 = sbr.rel (%p631) target = $region48
      $region47: #{_lambda_.1} parent=11 // pred_region
        _
      $region48: #{_lambda_.1} parent=11 // pred_fallthru
        _
      // Predicated region
      $region49: #{_lambda_.1} parent=11 // pred_check
        %p634 = pneg %p267
      $region50: #{_lambda_.1} parent=11 // pred_check_branch
        %636 = sbr.rel (%p634) target = $region52
      $region51: #{_lambda_.1} parent=11 // pred_region
        _
      $region52: #{_lambda_.1} parent=11 // pred_fallthru
        _
      // Predicated region
      $region53: #{_lambda_.1} parent=11 // pred_check
        %p637 = pneg %p288
      $region54: #{_lambda_.1} parent=11 // pred_check_branch
        %639 = sbr.rel (%p637) target = $region56
      $region55: #{_lambda_.1} parent=11 // pred_region
        _
      $region56: #{_lambda_.1} parent=11 // pred_fallthru
        _
      // Predicated region
      $region57: #{_lambda_.1} parent=11 // pred_check
        %p640 = pneg %p309
      $region58: #{_lambda_.1} parent=11 // pred_check_branch
        %642 = sbr.rel (%p640) target = $region60
      $region59: #{_lambda_.1} parent=11 // pred_region
        _
      $region60: #{_lambda_.1} parent=11 // pred_fallthru
        _
      // Predicated region
      $region61: #{_lambda_.1} parent=11 // pred_check
        %p643 = pneg %p330
      $region62: #{_lambda_.1} parent=11 // pred_check_branch
        %645 = sbr.rel (%p643) target = $region64
      $region63: #{_lambda_.1} parent=11 // pred_region
        _
      $region64: #{_lambda_.1} parent=11 // pred_fallthru
        _
      // Predicated region
      $region65: #{_lambda_.1} parent=11 // pred_check
        %p646 = pneg %p351
      $region66: #{_lambda_.1} parent=11 // pred_check_branch
        %648 = sbr.rel (%p646) target = $region68
      $region67: #{_lambda_.1} parent=11 // pred_region
        _
      $region68: #{_lambda_.1} parent=11 // pred_fallthru
        _
      // Predicated region
      $region69: #{_lambda_.1} parent=11 // pred_check
        %p649 = pneg %p372
      $region70: #{_lambda_.1} parent=11 // pred_check_branch
        %651 = sbr.rel (%p649) target = $region72
      $region71: #{_lambda_.1} parent=11 // pred_region
        _
      $region72: #{_lambda_.1} parent=11 // pred_fallthru
        _
      // Predicated region
      $region73: #{_lambda_.1} parent=11 // pred_check
        %p652 = pneg %p393
      $region74: #{_lambda_.1} parent=11 // pred_check_branch
        %654 = sbr.rel (%p652) target = $region76
      $region75: #{_lambda_.1} parent=11 // pred_region
        _
      $region76: #{_lambda_.1} parent=11 // pred_fallthru
        _
      // Predicated region
      $region77: #{_lambda_.1} parent=11 // pred_check
        %p655 = pneg %p414
      $region78: #{_lambda_.1} parent=11 // pred_check_branch
        %657 = sbr.rel (%p655) target = $region80
      $region79: #{_lambda_.1} parent=11 // pred_region
        _
      $region80: #{_lambda_.1} parent=11 // pred_fallthru
        _
      // Predicated region
      $region81: #{_lambda_.1} parent=11 // pred_check
        %p658 = pneg %p435
      $region82: #{_lambda_.1} parent=11 // pred_check_branch
        %660 = sbr.rel (%p658) target = $region84
      $region83: #{_lambda_.1} parent=11 // pred_region
        _
      $region84: #{_lambda_.1} parent=11 // pred_fallthru
        _
      // Predicated region
      $region85: #{_lambda_.1} parent=11 // pred_check
        %p661 = pneg %p456
      $region86: #{_lambda_.1} parent=11 // pred_check_branch
        %663 = sbr.rel (%p661) target = $region88
      $region87: #{_lambda_.1} parent=11 // pred_region
        _
      $region88: #{_lambda_.1} parent=11 // pred_fallthru
        _
      // Predicated region
      $region89: #{_lambda_.1} parent=11 // pred_check
        %p664 = pneg %p477
      $region90: #{_lambda_.1} parent=11 // pred_check_branch
        %666 = sbr.rel (%p664) target = $region92
      $region91: #{_lambda_.1} parent=11 // pred_region
        _
      $region92: #{_lambda_.1} parent=11 // pred_fallthru
        _
      // Predicated region
      $region93: #{_lambda_.1} parent=11 // pred_check
        %p667 = pneg %p498
      $region94: #{_lambda_.1} parent=11 // pred_check_branch
        %669 = sbr.rel (%p667) target = $region96
      $region95: #{_lambda_.1} parent=11 // pred_region
        _
      $region96: #{_lambda_.1} parent=11 // pred_fallthru
        _
    $region12: #{_lambda_.1} parent=5 // pred_fallthru
      _
    %p670 = scmp.lt.s32.totalorder %s30, 2
    // Predicated region
    $region97: #{_lambda_.1} parent=5 // pred_check
      %p671 = pneg %p670
    $region98: #{_lambda_.1} parent=5 // pred_check_branch
      %673 = sbr.rel (%p671) target = $region100
    $region99: #{_lambda_.1} parent=5 // pred_region
      _
    $region100: #{_lambda_.1} parent=5 // pred_fallthru
      _
    %p674 = scmp.le.s32.totalorder 1, %s30
    %p675 = scmp.lt.s32.totalorder %s30, 3
    %p676 = pnand %p674, %p675
    %p677 = pneg %p676
    // Predicated region
    $region101: #{_lambda_.1} parent=5 // pred_check
      _
    $region102: #{_lambda_.1} parent=5 // pred_check_branch
      %679 = sbr.rel (%p676) target = $region104
    $region103: #{_lambda_.1} parent=5 // pred_region
      %s680 = ssub.s32 %s30, 1
      %p681 = scmp.lt.s32.totalorder %s39, 0
      %s682 = scalar_select %p681, %s39, 0
      %s683 = smul.addr %s682, 2
      %s684 = scalar_lea.vmem %s0, %s683
      %p685 = pneg %p68
      %p686 = pneg %p65
      %p687 = scmp.lt.s32.totalorder %s39, 0
      %s688 = scalar_select %p687, %s39, 0
      %s689 = smul.addr %s688, 2
      %s690 = scalar_lea.vmem %s1, %s689
      %p691 = pneg %p94
      %p692 = pneg %p91
      %p693 = scmp.lt.s32.totalorder %s39, 0
      %s694 = scalar_select %p693, %s39, 0
      %s695 = smul.addr %s694, 4
      %s696 = scalar_lea.vmem %s2, %s695
      %p697 = pneg %p120
      %p698 = pneg %p117
      %p699 = pneg %p141
      %p700 = pneg %p138
      %p701 = pneg %p162
      %p702 = pneg %p159
      %p703 = pneg %p183
      %p704 = pneg %p180
      %p705 = pneg %p204
      %p706 = pneg %p201
      %p707 = pneg %p225
      %p708 = pneg %p222
      %p709 = pneg %p246
      %p710 = pneg %p243
      %p711 = pneg %p267
      %p712 = pneg %p264
      %p713 = pneg %p288
      %p714 = pneg %p285
      %p715 = pneg %p309
      %p716 = pneg %p306
      %p717 = pneg %p330
      %p718 = pneg %p327
      %p719 = pneg %p351
      %p720 = pneg %p348
      %p721 = pneg %p372
      %p722 = pneg %p369
      %p723 = pneg %p393
      %p724 = pneg %p390
      %p725 = pneg %p414
      %p726 = pneg %p411
      %p727 = pneg %p435
      %p728 = pneg %p432
      %p729 = pneg %p456
      %p730 = pneg %p453
      %p731 = pneg %p477
      %p732 = pneg %p474
      %p733 = pneg %p498
      %p734 = pneg %p495
      %p735 = pneg %p526
      %p736 = pneg %p523
      %p737 = scmp.lt.s32.totalorder %s40, 1
      %s738 = scalar_select %p737, %s40, 1
      %p739 = scmp.lt.s32.totalorder %s39, 0
      %s740 = scalar_select %p739, %s39, 0
      %s741 = sadd.s32 %s740, %s738
      %s742 = smul.addr %s741, 2
      %s743 = scalar_lea.vmem %s21, %s742
      %p744 = pneg %p554
      %p745 = pneg %p551
      %p746 = scmp.lt.s32.totalorder %s40, 1
      %s747 = scalar_select %p746, %s40, 1
      %p748 = scmp.lt.s32.totalorder %s39, 0
      %s749 = scalar_select %p748, %s39, 0
      %s750 = sadd.s32 %s749, %s747
      %s751 = smul.addr %s750, 2
      %s752 = scalar_lea.vmem %s22, %s751
      %p753 = pneg %p580
      %p754 = pneg %p577
      %p755 = scmp.lt.s32.totalorder %s39, 0
      %s756 = scalar_select %p755, %s39, 0
      %s757 = scalar_lea.vmem %s23, %s756
      %p758 = scmp.lt.s32.totalorder %s39, 0
      %s759 = scalar_select %p758, %s39, 0
      %s760 = smul.addr %s759, 2
      %s761 = scalar_lea.vmem %s0, %s760
      %p762 = scmp.lt.s32.totalorder %s39, 0
      %s763 = scalar_select %p762, %s39, 0
      %s764 = smul.addr %s763, 2
      %s765 = scalar_lea.vmem %s1, %s764
      %p766 = scmp.lt.s32.totalorder %s39, 0
      %s767 = scalar_select %p766, %s39, 0
      %s768 = smul.addr %s767, 4
      %s769 = scalar_lea.vmem %s2, %s768
      %p770 = scmp.lt.s32.totalorder %s40, 1
      %s771 = scalar_select %p770, %s40, 1
      %p772 = scmp.lt.s32.totalorder %s39, 0
      %s773 = scalar_select %p772, %s39, 0
      %s774 = sadd.s32 %s773, %s771
      %s775 = smul.addr %s774, 2
      %s776 = scalar_lea.vmem %s21, %s775
      %p777 = scmp.lt.s32.totalorder %s40, 1
      %s778 = scalar_select %p777, %s40, 1
      %p779 = scmp.lt.s32.totalorder %s39, 0
      %s780 = scalar_select %p779, %s39, 0
      %s781 = sadd.s32 %s780, %s778
      %s782 = smul.addr %s781, 2
      %s783 = scalar_lea.vmem %s22, %s782
      %p784 = scmp.lt.s32.totalorder %s39, 0
      %s785 = scalar_select %p784, %s39, 0
      %s786 = scalar_lea.vmem %s23, %s785
      %p787 = scmp.eq.s32.totalorder %s40, 0
      // Predicated region
      $region105: #{_lambda_.1} parent=103 // pred_check
        %p788 = pneg %p787
      $region106: #{_lambda_.1} parent=103 // pred_check_branch
        %790 = sbr.rel (%p788) target = $region108
      $region107: #{_lambda_.1} parent=103 // pred_region
        %v791 = vld [vmem:[%s761] sm:$0x3]
        %vm792 = vcmask 58368
        %793 = vst.msk [vmem:[#allocation2] sm:$0x3] %vm792, %v791
        %v794 = vld [vmem:[%s765] sm:$0x3]
        %795 = vst.msk [vmem:[#allocation3] sm:$0x3] %vm792, %v794
        %vm796 = vcmask 57344
        %797 = vst.msk [vmem:[%s786] sm:$0x1] %vm796, 0.0
      $region108: #{_lambda_.1} parent=103 // pred_fallthru
        _
      %v798 = vld [vmem:[#allocation2] sm:$0x3]
      %v799 = vld [vmem:[#allocation3] sm:$0x3]
      %s800 = smul.u32 %s40, 2
      %s801 = scalar_lea.vmem %s3, %s800
      %v802 = vld [vmem:[%s801] sm:$0x3]
      %s803 = scalar_lea.vmem %s4, %s800
      %v804 = vld [vmem:[%s803] sm:$0x3]
      %vm805 = vcmask 15360
      %v807 = vsel %vm805, %v804, 0
      %vm809 = vcmask 1041408
      %v811 = vsel %vm809, %v799, 0
      %813 = vmatprep.subr.mxu0 0.0
      %814 = vmatpush1.msra.mxu0 %v811
      %815 = vmatprep.subr.mxu0 0.0
      %816 = vmatpush1.msra.mxu0 0.0
      %817 = vmatprep.subr.mxu0 0.0
      %818 = vmatpush1.msra.mxu0 0.0
      %819 = vmatprep.subr.mxu0 0.0
      %820 = vmatpush1.msra.mxu0 0.0
      %821 = vmatprep.subr.mxu0 0.0
      %822 = vmatpush1.msra.mxu0 0.0
      %823 = vmatprep.subr.mxu0 0.0
      %824 = vmatpush1.msra.mxu0 0.0
      %825 = vmatprep.subr.mxu0 0.0
      %826 = vmatpush1.msra.mxu0 0.0
      %827 = vmatprep.subr.mxu0 0.0
      %828 = vmatpush1.msra.mxu0 0.0
      %829 = vmatprep.subr.mxu0 0.0
      %830 = vmatpush1.msra.mxu0 0.0
      %831 = vmatprep.subr.mxu0 0.0
      %832 = vmatpush1.msra.mxu0 0.0
      %833 = vmatprep.subr.mxu0 0.0
      %834 = vmatpush1.msra.mxu0 0.0
      %835 = vmatprep.subr.mxu0 0.0
      %836 = vmatpush1.msra.mxu0 0.0
      %837 = vmatprep.subr.mxu0 0.0
      %838 = vmatpush1.msra.mxu0 0.0
      %839 = vmatprep.subr.mxu0 0.0
      %840 = vmatpush1.msra.mxu0 0.0
      %841 = vmatprep.subr.mxu0 0.0
      %842 = vmatpush1.msra.mxu0 0.0
      %843 = vmatprep.subr.mxu0 0.0
      %844 = vmatpush1.msra.mxu0 0.0
      %845 = vmatprep.subr.mxu0 0.0
      %846 = vmatpush1.msra.mxu0 0.0
      %847 = vmatprep.subr.mxu0 0.0
      %848 = vmatpush1.msra.mxu0 0.0
      %849 = vmatprep.subr.mxu0 0.0
      %850 = vmatpush1.msra.mxu0 0.0
      %851 = vmatprep.subr.mxu0 0.0
      %852 = vmatpush1.msra.mxu0 0.0
      %853 = vmatprep.subr.mxu0 0.0
      %854 = vmatpush1.msra.mxu0 0.0
      %855 = vmatprep.subr.mxu0 0.0
      %856 = vmatpush1.msra.mxu0 0.0
      %857 = vmatprep.subr.mxu0 0.0
      %858 = vmatpush1.msra.mxu0 0.0
      %859 = vmatprep.subr.mxu0 0.0
      %860 = vmatpush1.msra.mxu0 0.0
      %861 = vmatprep.subr.mxu0 0.0
      %862 = vmatpush1.msra.mxu0 0.0
      %863 = vmatprep.subr.mxu0 0.0
      %864 = vmatpush1.msra.mxu0 0.0
      %865 = vmatprep.subr.mxu0 0.0
      %866 = vmatpush1.msra.mxu0 0.0
      %867 = vmatprep.subr.mxu0 0.0
      %868 = vmatpush1.msra.mxu0 0.0
      %869 = vmatprep.subr.mxu0 0.0
      %870 = vmatpush1.msra.mxu0 0.0
      %871 = vmatprep.subr.mxu0 0.0
      %872 = vmatpush1.msra.mxu0 0.0
      %873 = vmatprep.subr.mxu0 0.0
      %874 = vmatpush1.msra.mxu0 0.0
      %875 = vmatprep.subr.mxu0 0.0
      %876 = vmatpush1.msra.mxu0 0.0
      %877 = vmatprep.mubr.f32.mxu0 0.0
      %878 = vmatmul.mubr.f32.gmra.mrb[0].mxu0 %v807
      %v879 = vpop.f32.mrb[0].mxu0
      %v880 = vadd.f32 0.0, %v879
      %v881 = vpop.f32.mrb[0].mxu0
      %882 = vdwg.mxu0
      %v884 = vsel %vm805, %v802, 0
      %v887 = vsel %vm809, %v798, 0
      %889 = vmatprep.subr.mxu0 0.0
      %890 = vmatpush1.msra.mxu0 %v887
      %891 = vmatprep.subr.mxu0 0.0
      %892 = vmatpush1.msra.mxu0 0.0
      %893 = vmatprep.subr.mxu0 0.0
      %894 = vmatpush1.msra.mxu0 0.0
      %895 = vmatprep.subr.mxu0 0.0
      %896 = vmatpush1.msra.mxu0 0.0
      %897 = vmatprep.subr.mxu0 0.0
      %898 = vmatpush1.msra.mxu0 0.0
      %899 = vmatprep.subr.mxu0 0.0
      %900 = vmatpush1.msra.mxu0 0.0
      %901 = vmatprep.subr.mxu0 0.0
      %902 = vmatpush1.msra.mxu0 0.0
      %903 = vmatprep.subr.mxu0 0.0
      %904 = vmatpush1.msra.mxu0 0.0
      %905 = vmatprep.subr.mxu0 0.0
      %906 = vmatpush1.msra.mxu0 0.0
      %907 = vmatprep.subr.mxu0 0.0
      %908 = vmatpush1.msra.mxu0 0.0
      %909 = vmatprep.subr.mxu0 0.0
      %910 = vmatpush1.msra.mxu0 0.0
      %911 = vmatprep.subr.mxu0 0.0
      %912 = vmatpush1.msra.mxu0 0.0
      %913 = vmatprep.subr.mxu0 0.0
      %914 = vmatpush1.msra.mxu0 0.0
      %915 = vmatprep.subr.mxu0 0.0
      %916 = vmatpush1.msra.mxu0 0.0
      %917 = vmatprep.subr.mxu0 0.0
      %918 = vmatpush1.msra.mxu0 0.0
      %919 = vmatprep.subr.mxu0 0.0
      %920 = vmatpush1.msra.mxu0 0.0
      %921 = vmatprep.subr.mxu0 0.0
      %922 = vmatpush1.msra.mxu0 0.0
      %923 = vmatprep.subr.mxu0 0.0
      %924 = vmatpush1.msra.mxu0 0.0
      %925 = vmatprep.subr.mxu0 0.0
      %926 = vmatpush1.msra.mxu0 0.0
      %927 = vmatprep.subr.mxu0 0.0
      %928 = vmatpush1.msra.mxu0 0.0
      %929 = vmatprep.subr.mxu0 0.0
      %930 = vmatpush1.msra.mxu0 0.0
      %931 = vmatprep.subr.mxu0 0.0
      %932 = vmatpush1.msra.mxu0 0.0
      %933 = vmatprep.subr.mxu0 0.0
      %934 = vmatpush1.msra.mxu0 0.0
      %935 = vmatprep.subr.mxu0 0.0
      %936 = vmatpush1.msra.mxu0 0.0
      %937 = vmatprep.subr.mxu0 0.0
      %938 = vmatpush1.msra.mxu0 0.0
      %939 = vmatprep.subr.mxu0 0.0
      %940 = vmatpush1.msra.mxu0 0.0
      %941 = vmatprep.subr.mxu0 0.0
      %942 = vmatpush1.msra.mxu0 0.0
      %943 = vmatprep.subr.mxu0 0.0
      %944 = vmatpush1.msra.mxu0 0.0
      %945 = vmatprep.subr.mxu0 0.0
      %946 = vmatpush1.msra.mxu0 0.0
      %947 = vmatprep.subr.mxu0 0.0
      %948 = vmatpush1.msra.mxu0 0.0
      %949 = vmatprep.subr.mxu0 0.0
      %950 = vmatpush1.msra.mxu0 0.0
      %951 = vmatprep.subr.mxu0 0.0
      %952 = vmatpush1.msra.mxu0 0.0
      %953 = vmatprep.mubr.f32.mxu0 0.0
      %954 = vmatmul.mubr.f32.gmra.mrb[0].mxu0 %v884
      %v955 = vpop.f32.mrb[0].mxu0
      %v956 = vadd.f32 %v880, %v955
      %v957 = vpop.f32.mrb[0].mxu0
      %958 = vdwg.mxu0
      %s959 = scalar_lea.vmem %s5, %s800
      %v960 = vld [vmem:[%s959] sm:$0x3]
      %s961 = scalar_lea.vmem %s6, %s800
      %v962 = vld [vmem:[%s961] sm:$0x3]
      %v964 = vsel %vm805, %v962, 0
      %966 = vmatprep.subr.mxu0 0.0
      %967 = vmatpush1.msra.mxu0 %v811
      %968 = vmatprep.subr.mxu0 0.0
      %969 = vmatpush1.msra.mxu0 0.0
      %970 = vmatprep.subr.mxu0 0.0
      %971 = vmatpush1.msra.mxu0 0.0
      %972 = vmatprep.subr.mxu0 0.0
      %973 = vmatpush1.msra.mxu0 0.0
      %974 = vmatprep.subr.mxu0 0.0
      %975 = vmatpush1.msra.mxu0 0.0
      %976 = vmatprep.subr.mxu0 0.0
      %977 = vmatpush1.msra.mxu0 0.0
      %978 = vmatprep.subr.mxu0 0.0
      %979 = vmatpush1.msra.mxu0 0.0
      %980 = vmatprep.subr.mxu0 0.0
      %981 = vmatpush1.msra.mxu0 0.0
      %982 = vmatprep.subr.mxu0 0.0
      %983 = vmatpush1.msra.mxu0 0.0
      %984 = vmatprep.subr.mxu0 0.0
      %985 = vmatpush1.msra.mxu0 0.0
      %986 = vmatprep.subr.mxu0 0.0
      %987 = vmatpush1.msra.mxu0 0.0
      %988 = vmatprep.subr.mxu0 0.0
      %989 = vmatpush1.msra.mxu0 0.0
      %990 = vmatprep.subr.mxu0 0.0
      %991 = vmatpush1.msra.mxu0 0.0
      %992 = vmatprep.subr.mxu0 0.0
      %993 = vmatpush1.msra.mxu0 0.0
      %994 = vmatprep.subr.mxu0 0.0
      %995 = vmatpush1.msra.mxu0 0.0
      %996 = vmatprep.subr.mxu0 0.0
      %997 = vmatpush1.msra.mxu0 0.0
      %998 = vmatprep.subr.mxu0 0.0
      %999 = vmatpush1.msra.mxu0 0.0
      %1000 = vmatprep.subr.mxu0 0.0
      %1001 = vmatpush1.msra.mxu0 0.0
      %1002 = vmatprep.subr.mxu0 0.0
      %1003 = vmatpush1.msra.mxu0 0.0
      %1004 = vmatprep.subr.mxu0 0.0
      %1005 = vmatpush1.msra.mxu0 0.0
      %1006 = vmatprep.subr.mxu0 0.0
      %1007 = vmatpush1.msra.mxu0 0.0
      %1008 = vmatprep.subr.mxu0 0.0
      %1009 = vmatpush1.msra.mxu0 0.0
      %1010 = vmatprep.subr.mxu0 0.0
      %1011 = vmatpush1.msra.mxu0 0.0
      %1012 = vmatprep.subr.mxu0 0.0
      %1013 = vmatpush1.msra.mxu0 0.0
      %1014 = vmatprep.subr.mxu0 0.0
      %1015 = vmatpush1.msra.mxu0 0.0
      %1016 = vmatprep.subr.mxu0 0.0
      %1017 = vmatpush1.msra.mxu0 0.0
      %1018 = vmatprep.subr.mxu0 0.0
      %1019 = vmatpush1.msra.mxu0 0.0
      %1020 = vmatprep.subr.mxu0 0.0
      %1021 = vmatpush1.msra.mxu0 0.0
      %1022 = vmatprep.subr.mxu0 0.0
      %1023 = vmatpush1.msra.mxu0 0.0
      %1024 = vmatprep.subr.mxu0 0.0
      %1025 = vmatpush1.msra.mxu0 0.0
      %1026 = vmatprep.subr.mxu0 0.0
      %1027 = vmatpush1.msra.mxu0 0.0
      %1028 = vmatprep.subr.mxu0 0.0
      %1029 = vmatpush1.msra.mxu0 0.0
      %1030 = vmatprep.mubr.f32.mxu0 0.0
      %1031 = vmatmul.mubr.f32.gmra.mrb[0].mxu0 %v964
      %v1032 = vpop.f32.mrb[0].mxu0
      %v1033 = vadd.f32 0.0, %v1032
      %v1034 = vpop.f32.mrb[0].mxu0
      %1035 = vdwg.mxu0
      %v1037 = vsel %vm805, %v960, 0
      %1039 = vmatprep.subr.mxu0 0.0
      %1040 = vmatpush1.msra.mxu0 %v887
      %1041 = vmatprep.subr.mxu0 0.0
      %1042 = vmatpush1.msra.mxu0 0.0
      %1043 = vmatprep.subr.mxu0 0.0
      %1044 = vmatpush1.msra.mxu0 0.0
      %1045 = vmatprep.subr.mxu0 0.0
      %1046 = vmatpush1.msra.mxu0 0.0
      %1047 = vmatprep.subr.mxu0 0.0
      %1048 = vmatpush1.msra.mxu0 0.0
      %1049 = vmatprep.subr.mxu0 0.0
      %1050 = vmatpush1.msra.mxu0 0.0
      %1051 = vmatprep.subr.mxu0 0.0
      %1052 = vmatpush1.msra.mxu0 0.0
      %1053 = vmatprep.subr.mxu0 0.0
      %1054 = vmatpush1.msra.mxu0 0.0
      %1055 = vmatprep.subr.mxu0 0.0
      %1056 = vmatpush1.msra.mxu0 0.0
      %1057 = vmatprep.subr.mxu0 0.0
      %1058 = vmatpush1.msra.mxu0 0.0
      %1059 = vmatprep.subr.mxu0 0.0
      %1060 = vmatpush1.msra.mxu0 0.0
      %1061 = vmatprep.subr.mxu0 0.0
      %1062 = vmatpush1.msra.mxu0 0.0
      %1063 = vmatprep.subr.mxu0 0.0
      %1064 = vmatpush1.msra.mxu0 0.0
      %1065 = vmatprep.subr.mxu0 0.0
      %1066 = vmatpush1.msra.mxu0 0.0
      %1067 = vmatprep.subr.mxu0 0.0
      %1068 = vmatpush1.msra.mxu0 0.0
      %1069 = vmatprep.subr.mxu0 0.0
      %1070 = vmatpush1.msra.mxu0 0.0
      %1071 = vmatprep.subr.mxu0 0.0
      %1072 = vmatpush1.msra.mxu0 0.0
      %1073 = vmatprep.subr.mxu0 0.0
      %1074 = vmatpush1.msra.mxu0 0.0
      %1075 = vmatprep.subr.mxu0 0.0
      %1076 = vmatpush1.msra.mxu0 0.0
      %1077 = vmatprep.subr.mxu0 0.0
      %1078 = vmatpush1.msra.mxu0 0.0
      %1079 = vmatprep.subr.mxu0 0.0
      %1080 = vmatpush1.msra.mxu0 0.0
      %1081 = vmatprep.subr.mxu0 0.0
      %1082 = vmatpush1.msra.mxu0 0.0
      %1083 = vmatprep.subr.mxu0 0.0
      %1084 = vmatpush1.msra.mxu0 0.0
      %1085 = vmatprep.subr.mxu0 0.0
      %1086 = vmatpush1.msra.mxu0 0.0
      %1087 = vmatprep.subr.mxu0 0.0
      %1088 = vmatpush1.msra.mxu0 0.0
      %1089 = vmatprep.subr.mxu0 0.0
      %1090 = vmatpush1.msra.mxu0 0.0
      %1091 = vmatprep.subr.mxu0 0.0
      %1092 = vmatpush1.msra.mxu0 0.0
      %1093 = vmatprep.subr.mxu0 0.0
      %1094 = vmatpush1.msra.mxu0 0.0
      %1095 = vmatprep.subr.mxu0 0.0
      %1096 = vmatpush1.msra.mxu0 0.0
      %1097 = vmatprep.subr.mxu0 0.0
      %1098 = vmatpush1.msra.mxu0 0.0
      %1099 = vmatprep.subr.mxu0 0.0
      %1100 = vmatpush1.msra.mxu0 0.0
      %1101 = vmatprep.subr.mxu0 0.0
      %1102 = vmatpush1.msra.mxu0 0.0
      %1103 = vmatprep.mubr.f32.mxu0 0.0
      %1104 = vmatmul.mubr.f32.gmra.mrb[0].mxu0 %v1037
      %v1105 = vpop.f32.mrb[0].mxu0
      %v1106 = vadd.f32 %v1033, %v1105
      %v1107 = vpop.f32.mrb[0].mxu0
      %1108 = vdwg.mxu0
      %s1109 = smul.u32 %s40, 64
      %s1110 = scalar_lea.vmem %s7, %s1109
      %v1111 = vld [vmem:[%s1110] sm:$0xff]
      %v1112 = vld [vmem:[%s1110 + $0x8] sm:$0xff]
      %v1113 = vld [vmem:[%s1110 + $0x10] sm:$0xff]
      %v1114 = vld [vmem:[%s1110 + $0x18] sm:$0xff]
      %v1115 = vld [vmem:[%s1110 + $0x20] sm:$0xff]
      %v1116 = vld [vmem:[%s1110 + $0x28] sm:$0xff]
      %v1117 = vld [vmem:[%s1110 + $0x30] sm:$0xff]
      %v1118 = vld [vmem:[%s1110 + $0x38] sm:$0xff]
      %s1119 = scalar_lea.vmem %s8, %s1109
      %v1120 = vld [vmem:[%s1119] sm:$0xff]
      %v1121 = vld [vmem:[%s1119 + $0x8] sm:$0xff]
      %v1122 = vld [vmem:[%s1119 + $0x10] sm:$0xff]
      %v1123 = vld [vmem:[%s1119 + $0x18] sm:$0xff]
      %v1124 = vld [vmem:[%s1119 + $0x20] sm:$0xff]
      %v1125 = vld [vmem:[%s1119 + $0x28] sm:$0xff]
      %v1126 = vld [vmem:[%s1119 + $0x30] sm:$0xff]
      %v1127 = vld [vmem:[%s1119 + $0x38] sm:$0xff]
      %v1128 = vld [vmem:[%s769] sm:$0xf]
      %vm1129 = vcmask 31744
      %v1131 = vsel %vm1129, %v1120, 0
      %v1134 = vsel %vm1129, %v1121, 0
      %v1137 = vsel %vm1129, %v1122, 0
      %v1140 = vsel %vm1129, %v1123, 0
      %v1143 = vsel %vm1129, %v1124, 0
      %v1146 = vsel %vm1129, %v1125, 0
      %v1149 = vsel %vm1129, %v1126, 0
      %v1152 = vsel %vm1129, %v1127, 0
      %vm1154 = vcmask 1043456
      %v1156 = vsel %vm1154, %v1128, 0
      %1158 = vmatprep.subr.mxu0 0.0
      %1159 = vmatpush1.msra.mxu0 %v1156
      %1160 = vmatprep.subr.mxu0 0.0
      %1161 = vmatpush1.msra.mxu0 0.0
      %1162 = vmatprep.subr.mxu0 0.0
      %1163 = vmatpush1.msra.mxu0 0.0
      %1164 = vmatprep.subr.mxu0 0.0
      %1165 = vmatpush1.msra.mxu0 0.0
      %1166 = vmatprep.subr.mxu0 0.0
      %1167 = vmatpush1.msra.mxu0 0.0
      %1168 = vmatprep.subr.mxu0 0.0
      %1169 = vmatpush1.msra.mxu0 0.0
      %1170 = vmatprep.subr.mxu0 0.0
      %1171 = vmatpush1.msra.mxu0 0.0
      %1172 = vmatprep.subr.mxu0 0.0
      %1173 = vmatpush1.msra.mxu0 0.0
      %1174 = vmatprep.subr.mxu0 0.0
      %1175 = vmatpush1.msra.mxu0 0.0
      %1176 = vmatprep.subr.mxu0 0.0
      %1177 = vmatpush1.msra.mxu0 0.0
      %1178 = vmatprep.subr.mxu0 0.0
      %1179 = vmatpush1.msra.mxu0 0.0
      %1180 = vmatprep.subr.mxu0 0.0
      %1181 = vmatpush1.msra.mxu0 0.0
      %1182 = vmatprep.subr.mxu0 0.0
      %1183 = vmatpush1.msra.mxu0 0.0
      %1184 = vmatprep.subr.mxu0 0.0
      %1185 = vmatpush1.msra.mxu0 0.0
      %1186 = vmatprep.subr.mxu0 0.0
      %1187 = vmatpush1.msra.mxu0 0.0
      %1188 = vmatprep.subr.mxu0 0.0
      %1189 = vmatpush1.msra.mxu0 0.0
      %1190 = vmatprep.subr.mxu0 0.0
      %1191 = vmatpush1.msra.mxu0 0.0
      %1192 = vmatprep.subr.mxu0 0.0
      %1193 = vmatpush1.msra.mxu0 0.0
      %1194 = vmatprep.subr.mxu0 0.0
      %1195 = vmatpush1.msra.mxu0 0.0
      %1196 = vmatprep.subr.mxu0 0.0
      %1197 = vmatpush1.msra.mxu0 0.0
      %1198 = vmatprep.subr.mxu0 0.0
      %1199 = vmatpush1.msra.mxu0 0.0
      %1200 = vmatprep.subr.mxu0 0.0
      %1201 = vmatpush1.msra.mxu0 0.0
      %1202 = vmatprep.subr.mxu0 0.0
      %1203 = vmatpush1.msra.mxu0 0.0
      %1204 = vmatprep.subr.mxu0 0.0
      %1205 = vmatpush1.msra.mxu0 0.0
      %1206 = vmatprep.subr.mxu0 0.0
      %1207 = vmatpush1.msra.mxu0 0.0
      %1208 = vmatprep.subr.mxu0 0.0
      %1209 = vmatpush1.msra.mxu0 0.0
      %1210 = vmatprep.subr.mxu0 0.0
      %1211 = vmatpush1.msra.mxu0 0.0
      %1212 = vmatprep.subr.mxu0 0.0
      %1213 = vmatpush1.msra.mxu0 0.0
      %1214 = vmatprep.subr.mxu0 0.0
      %1215 = vmatpush1.msra.mxu0 0.0
      %1216 = vmatprep.subr.mxu0 0.0
      %1217 = vmatpush1.msra.mxu0 0.0
      %1218 = vmatprep.subr.mxu0 0.0
      %1219 = vmatpush1.msra.mxu0 0.0
      %1220 = vmatprep.subr.mxu0 0.0
      %1221 = vmatpush1.msra.mxu0 0.0
      %1222 = vmatprep.mubr.f32.mxu0 0.0
      %1223 = vmatmul.mubr.f32.gmra.mrb[0].mxu0 %v1131
      %v1224 = vpop.f32.mrb[0].mxu0
      %v1225 = vadd.f32 0.0, %v1224
      %v1226 = vpop.f32.mrb[0].mxu0
      %1227 = vmatprep.mubr.f32.mxu0 0.0
      %1228 = vmatmul.mubr.f32.gmra.mrb[0].mxu0 %v1134
      %v1229 = vpop.f32.mrb[0].mxu0
      %v1230 = vadd.f32 0.0, %v1229
      %v1231 = vpop.f32.mrb[0].mxu0
      %1232 = vmatprep.mubr.f32.mxu0 0.0
      %1233 = vmatmul.mubr.f32.gmra.mrb[0].mxu0 %v1137
      %v1234 = vpop.f32.mrb[0].mxu0
      %v1235 = vadd.f32 0.0, %v1234
      %v1236 = vpop.f32.mrb[0].mxu0
      %1237 = vmatprep.mubr.f32.mxu0 0.0
      %1238 = vmatmul.mubr.f32.gmra.mrb[0].mxu0 %v1140
      %v1239 = vpop.f32.mrb[0].mxu0
      %v1240 = vadd.f32 0.0, %v1239
      %v1241 = vpop.f32.mrb[0].mxu0
      %1242 = vmatprep.mubr.f32.mxu0 0.0
      %1243 = vmatmul.mubr.f32.gmra.mrb[0].mxu0 %v1143
      %v1244 = vpop.f32.mrb[0].mxu0
      %v1245 = vadd.f32 0.0, %v1244
      %v1246 = vpop.f32.mrb[0].mxu0
      %1247 = vmatprep.mubr.f32.mxu0 0.0
      %1248 = vmatmul.mubr.f32.gmra.mrb[0].mxu0 %v1146
      %v1249 = vpop.f32.mrb[0].mxu0
      %v1250 = vadd.f32 0.0, %v1249
      %v1251 = vpop.f32.mrb[0].mxu0
      %1252 = vmatprep.mubr.f32.mxu0 0.0
      %1253 = vmatmul.mubr.f32.gmra.mrb[0].mxu0 %v1149
      %v1254 = vpop.f32.mrb[0].mxu0
      %v1255 = vadd.f32 0.0, %v1254
      %v1256 = vpop.f32.mrb[0].mxu0
      %1257 = vmatprep.mubr.f32.mxu0 0.0
      %1258 = vmatmul.mubr.f32.gmra.mrb[0].mxu0 %v1152
      %v1259 = vpop.f32.mrb[0].mxu0
      %v1260 = vadd.f32 0.0, %v1259
      %v1261 = vpop.f32.mrb[0].mxu0
      %1262 = vdwg.mxu0
      %v1264 = vsel %vm805, %v1111, 0
      %v1267 = vsel %vm805, %v1112, 0
      %v1270 = vsel %vm805, %v1113, 0
      %v1273 = vsel %vm805, %v1114, 0
      %v1276 = vsel %vm805, %v1115, 0
      %v1279 = vsel %vm805, %v1116, 0
      %v1282 = vsel %vm805, %v1117, 0
      %v1285 = vsel %vm805, %v1118, 0
      %v1288 = vsel %vm809, %v956, 0
      %1290 = vmatprep.subr.mxu0 0.0
      %1291 = vmatpush1.msra.mxu0 %v1288
      %1292 = vmatprep.subr.mxu0 0.0
      %1293 = vmatpush1.msra.mxu0 0.0
      %1294 = vmatprep.subr.mxu0 0.0
      %1295 = vmatpush1.msra.mxu0 0.0
      %1296 = vmatprep.subr.mxu0 0.0
      %1297 = vmatpush1.msra.mxu0 0.0
      %1298 = vmatprep.subr.mxu0 0.0
      %1299 = vmatpush1.msra.mxu0 0.0
      %1300 = vmatprep.subr.mxu0 0.0
      %1301 = vmatpush1.msra.mxu0 0.0
      %1302 = vmatprep.subr.mxu0 0.0
      %1303 = vmatpush1.msra.mxu0 0.0
      %1304 = vmatprep.subr.mxu0 0.0
      %1305 = vmatpush1.msra.mxu0 0.0
      %1306 = vmatprep.subr.mxu0 0.0
      %1307 = vmatpush1.msra.mxu0 0.0
      %1308 = vmatprep.subr.mxu0 0.0
      %1309 = vmatpush1.msra.mxu0 0.0
      %1310 = vmatprep.subr.mxu0 0.0
      %1311 = vmatpush1.msra.mxu0 0.0
      %1312 = vmatprep.subr.mxu0 0.0
      %1313 = vmatpush1.msra.mxu0 0.0
      %1314 = vmatprep.subr.mxu0 0.0
      %1315 = vmatpush1.msra.mxu0 0.0
      %1316 = vmatprep.subr.mxu0 0.0
      %1317 = vmatpush1.msra.mxu0 0.0
      %1318 = vmatprep.subr.mxu0 0.0
      %1319 = vmatpush1.msra.mxu0 0.0
      %1320 = vmatprep.subr.mxu0 0.0
      %1321 = vmatpush1.msra.mxu0 0.0
      %1322 = vmatprep.subr.mxu0 0.0
      %1323 = vmatpush1.msra.mxu0 0.0
      %1324 = vmatprep.subr.mxu0 0.0
      %1325 = vmatpush1.msra.mxu0 0.0
      %1326 = vmatprep.subr.mxu0 0.0
      %1327 = vmatpush1.msra.mxu0 0.0
      %1328 = vmatprep.subr.mxu0 0.0
      %1329 = vmatpush1.msra.mxu0 0.0
      %1330 = vmatprep.subr.mxu0 0.0
      %1331 = vmatpush1.msra.mxu0 0.0
      %1332 = vmatprep.subr.mxu0 0.0
      %1333 = vmatpush1.msra.mxu0 0.0
      %1334 = vmatprep.subr.mxu0 0.0
      %1335 = vmatpush1.msra.mxu0 0.0
      %1336 = vmatprep.subr.mxu0 0.0
      %1337 = vmatpush1.msra.mxu0 0.0
      %1338 = vmatprep.subr.mxu0 0.0
      %1339 = vmatpush1.msra.mxu0 0.0
      %1340 = vmatprep.subr.mxu0 0.0
      %1341 = vmatpush1.msra.mxu0 0.0
      %1342 = vmatprep.subr.mxu0 0.0
      %1343 = vmatpush1.msra.mxu0 0.0
      %1344 = vmatprep.subr.mxu0 0.0
      %1345 = vmatpush1.msra.mxu0 0.0
      %1346 = vmatprep.subr.mxu0 0.0
      %1347 = vmatpush1.msra.mxu0 0.0
      %1348 = vmatprep.subr.mxu0 0.0
      %1349 = vmatpush1.msra.mxu0 0.0
      %1350 = vmatprep.subr.mxu0 0.0
      %1351 = vmatpush1.msra.mxu0 0.0
      %1352 = vmatprep.subr.mxu0 0.0
      %1353 = vmatpush1.msra.mxu0 0.0
      %1354 = vmatprep.mubr.f32.mxu0 0.0
      %1355 = vmatmul.mubr.f32.gmra.mrb[0].mxu0 %v1264
      %v1356 = vpop.f32.mrb[0].mxu0
      %v1357 = vadd.f32 %v1225, %v1356
      %v1358 = vpop.f32.mrb[0].mxu0
      %1359 = vmatprep.mubr.f32.mxu0 0.0
      %1360 = vmatmul.mubr.f32.gmra.mrb[0].mxu0 %v1267
      %v1361 = vpop.f32.mrb[0].mxu0
      %v1362 = vadd.f32 %v1230, %v1361
      %v1363 = vpop.f32.mrb[0].mxu0
      %1364 = vmatprep.mubr.f32.mxu0 0.0
      %1365 = vmatmul.mubr.f32.gmra.mrb[0].mxu0 %v1270
      %v1366 = vpop.f32.mrb[0].mxu0
      %v1367 = vadd.f32 %v1235, %v1366
      %v1368 = vpop.f32.mrb[0].mxu0
      %1369 = vmatprep.mubr.f32.mxu0 0.0
      %1370 = vmatmul.mubr.f32.gmra.mrb[0].mxu0 %v1273
      %v1371 = vpop.f32.mrb[0].mxu0
      %v1372 = vadd.f32 %v1240, %v1371
      %v1373 = vpop.f32.mrb[0].mxu0
      %1374 = vmatprep.mubr.f32.mxu0 0.0
      %1375 = vmatmul.mubr.f32.gmra.mrb[0].mxu0 %v1276
      %v1376 = vpop.f32.mrb[0].mxu0
      %v1377 = vadd.f32 %v1245, %v1376
      %v1378 = vpop.f32.mrb[0].mxu0
      %1379 = vmatprep.mubr.f32.mxu0 0.0
      %1380 = vmatmul.mubr.f32.gmra.mrb[0].mxu0 %v1279
      %v1381 = vpop.f32.mrb[0].mxu0
      %v1382 = vadd.f32 %v1250, %v1381
      %v1383 = vpop.f32.mrb[0].mxu0
      %1384 = vmatprep.mubr.f32.mxu0 0.0
      %1385 = vmatmul.mubr.f32.gmra.mrb[0].mxu0 %v1282
      %v1386 = vpop.f32.mrb[0].mxu0
      %v1387 = vadd.f32 %v1255, %v1386
      %v1388 = vpop.f32.mrb[0].mxu0
      %1389 = vmatprep.mubr.f32.mxu0 0.0
      %1390 = vmatmul.mubr.f32.gmra.mrb[0].mxu0 %v1285
      %v1391 = vpop.f32.mrb[0].mxu0
      %v1392 = vadd.f32 %v1260, %v1391
      %v1393 = vpop.f32.mrb[0].mxu0
      %1394 = vdwg.mxu0
      %s1395 = scalar_lea.vmem %s9, %s1109
      %v1396 = vld [vmem:[%s1395] sm:$0xff]
      %v1397 = vld [vmem:[%s1395 + $0x8] sm:$0xff]
      %v1398 = vld [vmem:[%s1395 + $0x10] sm:$0xff]
      %v1399 = vld [vmem:[%s1395 + $0x18] sm:$0xff]
      %v1400 = vld [vmem:[%s1395 + $0x20] sm:$0xff]
      %v1401 = vld [vmem:[%s1395 + $0x28] sm:$0xff]
      %v1402 = vld [vmem:[%s1395 + $0x30] sm:$0xff]
      %v1403 = vld [vmem:[%s1395 + $0x38] sm:$0xff]
      %1405 = vset.pattern.permute.xlu0 0
      %1406 = vperm.xlu0 %1405, %v1396
      %v1407 = vpop.permute.xlu0 %1406
      %1410 = vset.pattern.permute.xlu0 0
      %1411 = vperm.xlu0 %1410, %v1397
      %v1412 = vpop.permute.xlu0 %1411
      %1415 = vset.pattern.permute.xlu0 0
      %1416 = vperm.xlu0 %1415, %v1398
      %v1417 = vpop.permute.xlu0 %1416
      %1420 = vset.pattern.permute.xlu0 0
      %1421 = vperm.xlu0 %1420, %v1399
      %v1422 = vpop.permute.xlu0 %1421
      %1425 = vset.pattern.permute.xlu0 0
      %1426 = vperm.xlu0 %1425, %v1400
      %v1427 = vpop.permute.xlu0 %1426
      %1430 = vset.pattern.permute.xlu0 0
      %1431 = vperm.xlu0 %1430, %v1401
      %v1432 = vpop.permute.xlu0 %1431
      %1435 = vset.pattern.permute.xlu0 0
      %1436 = vperm.xlu0 %1435, %v1402
      %v1437 = vpop.permute.xlu0 %1436
      %1440 = vset.pattern.permute.xlu0 0
      %1441 = vperm.xlu0 %1440, %v1403
      %v1442 = vpop.permute.xlu0 %1441
      %v1444 = vadd.f32 %v1357, %v1407
      %v1445 = vadd.f32 %v1362, %v1412
      %v1446 = vadd.f32 %v1367, %v1417
      %v1447 = vadd.f32 %v1372, %v1422
      %v1448 = vadd.f32 %v1377, %v1427
      %v1449 = vadd.f32 %v1382, %v1432
      %v1450 = vadd.f32 %v1387, %v1437
      %v1451 = vadd.f32 %v1392, %v1442
      %vm1452 = vcmp.ge.f32.partialorder %v1444, 0.0
      %vm1453 = vcmp.ge.f32.partialorder %v1445, 0.0
      %vm1454 = vcmp.ge.f32.partialorder %v1446, 0.0
      %vm1455 = vcmp.ge.f32.partialorder %v1447, 0.0
      %vm1456 = vcmp.ge.f32.partialorder %v1448, 0.0
      %vm1457 = vcmp.ge.f32.partialorder %v1449, 0.0
      %vm1458 = vcmp.ge.f32.partialorder %v1450, 0.0
      %vm1459 = vcmp.ge.f32.partialorder %v1451, 0.0
      %v1460 = vmul.f32 %v1444, 0.01
      %v1461 = vmul.f32 %v1445, 0.01
      %v1462 = vmul.f32 %v1446, 0.01
      %v1463 = vmul.f32 %v1447, 0.01
      %v1464 = vmul.f32 %v1448, 0.01
      %v1465 = vmul.f32 %v1449, 0.01
      %v1466 = vmul.f32 %v1450, 0.01
      %v1467 = vmul.f32 %v1451, 0.01
      %v1468 = vsel %vm1452, %v1444, %v1460
      %v1469 = vsel %vm1453, %v1445, %v1461
      %v1470 = vsel %vm1454, %v1446, %v1462
      %v1471 = vsel %vm1455, %v1447, %v1463
      %v1472 = vsel %vm1456, %v1448, %v1464
      %v1473 = vsel %vm1457, %v1449, %v1465
      %v1474 = vsel %vm1458, %v1450, %v1466
      %v1475 = vsel %vm1459, %v1451, %v1467
      %s1476 = scalar_lea.vmem %s10, %s1109
      %v1477 = vld [vmem:[%s1476] sm:$0xff]
      %v1478 = vld [vmem:[%s1476 + $0x8] sm:$0xff]
      %v1479 = vld [vmem:[%s1476 + $0x10] sm:$0xff]
      %v1480 = vld [vmem:[%s1476 + $0x18] sm:$0xff]
      %v1481 = vld [vmem:[%s1476 + $0x20] sm:$0xff]
      %v1482 = vld [vmem:[%s1476 + $0x28] sm:$0xff]
      %v1483 = vld [vmem:[%s1476 + $0x30] sm:$0xff]
      %v1484 = vld [vmem:[%s1476 + $0x38] sm:$0xff]
      %s1485 = scalar_lea.vmem %s11, %s1109
      %v1486 = vld [vmem:[%s1485] sm:$0xff]
      %v1487 = vld [vmem:[%s1485 + $0x8] sm:$0xff]
      %v1488 = vld [vmem:[%s1485 + $0x10] sm:$0xff]
      %v1489 = vld [vmem:[%s1485 + $0x18] sm:$0xff]
      %v1490 = vld [vmem:[%s1485 + $0x20] sm:$0xff]
      %v1491 = vld [vmem:[%s1485 + $0x28] sm:$0xff]
      %v1492 = vld [vmem:[%s1485 + $0x30] sm:$0xff]
      %v1493 = vld [vmem:[%s1485 + $0x38] sm:$0xff]
      %vm1494 = vcmask 64512
      %v1495 = vsel %vm1494, %v1468, 0.0
      %v1496 = vsel %vm1494, %v1469, 0.0
      %v1497 = vadd.f32 %v1495, %v1496
      %v1498 = vsel %vm1494, %v1470, 0.0
      %v1499 = vadd.f32 %v1497, %v1498
      %v1500 = vsel %vm1494, %v1471, 0.0
      %v1501 = vadd.f32 %v1499, %v1500
      %v1502 = vrot.slane %v1501, 4
      %v1503 = vadd.f32 %v1501, %v1502
      %v1504 = vrot.slane %v1503, 2
      %v1505 = vadd.f32 %v1503, %v1504
      %v1506 = vrot.slane %v1505, 1
      %v1507 = vadd.f32 %v1505, %v1506
      %v1508 = vrcp.pop 32.0
      %v1509 = vmul.f32 %v1507, %v1508
      %v1510 = vsub.f32 %v1468, %v1509
      %v1511 = vsub.f32 %v1469, %v1509
      %v1512 = vsub.f32 %v1470, %v1509
      %v1513 = vsub.f32 %v1471, %v1509
      %v1514 = vmul.f32 %v1510, %v1510
      %v1515 = vmul.f32 %v1511, %v1511
      %v1516 = vmul.f32 %v1512, %v1512
      %v1517 = vmul.f32 %v1513, %v1513
      %v1518 = vsel %vm1494, %v1514, 0.0
      %v1519 = vsel %vm1494, %v1515, 0.0
      %v1520 = vadd.f32 %v1518, %v1519
      %v1521 = vsel %vm1494, %v1516, 0.0
      %v1522 = vadd.f32 %v1520, %v1521
      %v1523 = vsel %vm1494, %v1517, 0.0
      %v1524 = vadd.f32 %v1522, %v1523
      %v1525 = vrot.slane %v1524, 4
      %v1526 = vadd.f32 %v1524, %v1525
      %v1527 = vrot.slane %v1526, 2
      %v1528 = vadd.f32 %v1526, %v1527
      %v1529 = vrot.slane %v1528, 1
      %v1530 = vadd.f32 %v1528, %v1529
      %v1531 = vmul.f32 %v1530, %v1508
      %v1532 = vadd.f32 %v1531, 1e-05
      %v1533 = vrsqrt.pop %v1532
      %v1534 = vmul.f32 %v1510, %v1533
      %v1535 = vmul.f32 %v1511, %v1533
      %v1536 = vmul.f32 %v1512, %v1533
      %v1537 = vmul.f32 %v1513, %v1533
      %1539 = vset.pattern.permute.xlu0 0
      %1540 = vperm.xlu0 %1539, %v1477
      %v1541 = vpop.permute.xlu0 %1540
      %1544 = vset.pattern.permute.xlu0 0
      %1545 = vperm.xlu0 %1544, %v1478
      %v1546 = vpop.permute.xlu0 %1545
      %1549 = vset.pattern.permute.xlu0 0
      %1550 = vperm.xlu0 %1549, %v1479
      %v1551 = vpop.permute.xlu0 %1550
      %1554 = vset.pattern.permute.xlu0 0
      %1555 = vperm.xlu0 %1554, %v1480
      %v1556 = vpop.permute.xlu0 %1555
      %v1558 = vmul.f32 %v1534, %v1541
      %v1559 = vmul.f32 %v1535, %v1546
      %v1560 = vmul.f32 %v1536, %v1551
      %v1561 = vmul.f32 %v1537, %v1556
      %1563 = vset.pattern.permute.xlu0 0
      %1564 = vperm.xlu0 %1563, %v1486
      %v1565 = vpop.permute.xlu0 %1564
      %1568 = vset.pattern.permute.xlu0 0
      %1569 = vperm.xlu0 %1568, %v1487
      %v1570 = vpop.permute.xlu0 %1569
      %1573 = vset.pattern.permute.xlu0 0
      %1574 = vperm.xlu0 %1573, %v1488
      %v1575 = vpop.permute.xlu0 %1574
      %1578 = vset.pattern.permute.xlu0 0
      %1579 = vperm.xlu0 %1578, %v1489
      %v1580 = vpop.permute.xlu0 %1579
      %v1582 = vadd.f32 %v1558, %v1565
      %v1583 = vadd.f32 %v1559, %v1570
      %v1584 = vadd.f32 %v1560, %v1575
      %v1585 = vadd.f32 %v1561, %v1580
      %v1586 = vsel %vm1494, %v1472, 0.0
      %v1587 = vsel %vm1494, %v1473, 0.0
      %v1588 = vadd.f32 %v1586, %v1587
      %v1589 = vsel %vm1494, %v1474, 0.0
      %v1590 = vadd.f32 %v1588, %v1589
      %v1591 = vsel %vm1494, %v1475, 0.0
      %v1592 = vadd.f32 %v1590, %v1591
      %v1593 = vrot.slane %v1592, 4
      %v1594 = vadd.f32 %v1592, %v1593
      %v1595 = vrot.slane %v1594, 2
      %v1596 = vadd.f32 %v1594, %v1595
      %v1597 = vrot.slane %v1596, 1
      %v1598 = vadd.f32 %v1596, %v1597
      %v1599 = vmul.f32 %v1598, %v1508
      %v1600 = vsub.f32 %v1472, %v1599
      %v1601 = vsub.f32 %v1473, %v1599
      %v1602 = vsub.f32 %v1474, %v1599
      %v1603 = vsub.f32 %v1475, %v1599
      %v1604 = vmul.f32 %v1600, %v1600
      %v1605 = vmul.f32 %v1601, %v1601
      %v1606 = vmul.f32 %v1602, %v1602
      %v1607 = vmul.f32 %v1603, %v1603
      %v1608 = vsel %vm1494, %v1604, 0.0
      %v1609 = vsel %vm1494, %v1605, 0.0
      %v1610 = vadd.f32 %v1608, %v1609
      %v1611 = vsel %vm1494, %v1606, 0.0
      %v1612 = vadd.f32 %v1610, %v1611
      %v1613 = vsel %vm1494, %v1607, 0.0
      %v1614 = vadd.f32 %v1612, %v1613
      %v1615 = vrot.slane %v1614, 4
      %v1616 = vadd.f32 %v1614, %v1615
      %v1617 = vrot.slane %v1616, 2
      %v1618 = vadd.f32 %v1616, %v1617
      %v1619 = vrot.slane %v1618, 1
      %v1620 = vadd.f32 %v1618, %v1619
      %v1621 = vmul.f32 %v1620, %v1508
      %v1622 = vadd.f32 %v1621, 1e-05
      %v1623 = vrsqrt.pop %v1622
      %v1624 = vmul.f32 %v1600, %v1623
      %v1625 = vmul.f32 %v1601, %v1623
      %v1626 = vmul.f32 %v1602, %v1623
      %v1627 = vmul.f32 %v1603, %v1623
      %1629 = vset.pattern.permute.xlu0 0
      %1630 = vperm.xlu0 %1629, %v1481
      %v1631 = vpop.permute.xlu0 %1630
      %1634 = vset.pattern.permute.xlu0 0
      %1635 = vperm.xlu0 %1634, %v1482
      %v1636 = vpop.permute.xlu0 %1635
      %1639 = vset.pattern.permute.xlu0 0
      %1640 = vperm.xlu0 %1639, %v1483
      %v1641 = vpop.permute.xlu0 %1640
      %1644 = vset.pattern.permute.xlu0 0
      %1645 = vperm.xlu0 %1644, %v1484
      %v1646 = vpop.permute.xlu0 %1645
      %v1648 = vmul.f32 %v1624, %v1631
      %v1649 = vmul.f32 %v1625, %v1636
      %v1650 = vmul.f32 %v1626, %v1641
      %v1651 = vmul.f32 %v1627, %v1646
      %1653 = vset.pattern.permute.xlu0 0
      %1654 = vperm.xlu0 %1653, %v1490
      %v1655 = vpop.permute.xlu0 %1654
      %1658 = vset.pattern.permute.xlu0 0
      %1659 = vperm.xlu0 %1658, %v1491
      %v1660 = vpop.permute.xlu0 %1659
      %1663 = vset.pattern.permute.xlu0 0
      %1664 = vperm.xlu0 %1663, %v1492
      %v1665 = vpop.permute.xlu0 %1664
      %1668 = vset.pattern.permute.xlu0 0
      %1669 = vperm.xlu0 %1668, %v1493
      %v1670 = vpop.permute.xlu0 %1669
      %v1672 = vadd.f32 %v1648, %v1655
      %v1673 = vadd.f32 %v1649, %v1660
      %v1674 = vadd.f32 %v1650, %v1665
      %v1675 = vadd.f32 %v1651, %v1670
      %s1676 = scalar_lea.vmem %s14, %s1109
      %v1677 = vld [vmem:[%s1676] sm:$0xff]
      %v1678 = vld [vmem:[%s1676 + $0x8] sm:$0xff]
      %v1679 = vld [vmem:[%s1676 + $0x10] sm:$0xff]
      %v1680 = vld [vmem:[%s1676 + $0x18] sm:$0xff]
      %v1681 = vld [vmem:[%s1676 + $0x20] sm:$0xff]
      %v1682 = vld [vmem:[%s1676 + $0x28] sm:$0xff]
      %v1683 = vld [vmem:[%s1676 + $0x30] sm:$0xff]
      %v1684 = vld [vmem:[%s1676 + $0x38] sm:$0xff]
      %s1685 = scalar_lea.vmem %s15, %s1109
      %v1686 = vld [vmem:[%s1685] sm:$0xff]
      %v1687 = vld [vmem:[%s1685 + $0x8] sm:$0xff]
      %v1688 = vld [vmem:[%s1685 + $0x10] sm:$0xff]
      %v1689 = vld [vmem:[%s1685 + $0x18] sm:$0xff]
      %v1690 = vld [vmem:[%s1685 + $0x20] sm:$0xff]
      %v1691 = vld [vmem:[%s1685 + $0x28] sm:$0xff]
      %v1692 = vld [vmem:[%s1685 + $0x30] sm:$0xff]
      %v1693 = vld [vmem:[%s1685 + $0x38] sm:$0xff]
      %s1694 = scalar_lea.vmem %s16, %s1109
      %v1695 = vld [vmem:[%s1694] sm:$0xff]
      %v1696 = vld [vmem:[%s1694 + $0x8] sm:$0xff]
      %v1697 = vld [vmem:[%s1694 + $0x10] sm:$0xff]
      %v1698 = vld [vmem:[%s1694 + $0x18] sm:$0xff]
      %v1699 = vld [vmem:[%s1694 + $0x20] sm:$0xff]
      %v1700 = vld [vmem:[%s1694 + $0x28] sm:$0xff]
      %v1701 = vld [vmem:[%s1694 + $0x30] sm:$0xff]
      %v1702 = vld [vmem:[%s1694 + $0x38] sm:$0xff]
      %s1703 = smul.u32 %s40, 32
      %s1704 = scalar_lea.vmem %s12, %s1703
      %v1705 = vld [vmem:[%s1704] sm:$0xff]
      %v1706 = vld [vmem:[%s1704 + $0x8] sm:$0xff]
      %v1707 = vld [vmem:[%s1704 + $0x10] sm:$0xff]
      %v1708 = vld [vmem:[%s1704 + $0x18] sm:$0xff]
      %1710 = vset.pattern.permute.xlu0 0
      %1711 = vperm.xlu0 %1710, %v1677
      %v1712 = vpop.permute.xlu0 %1711
      %1715 = vset.pattern.permute.xlu0 0
      %1716 = vperm.xlu0 %1715, %v1678
      %v1717 = vpop.permute.xlu0 %1716
      %1720 = vset.pattern.permute.xlu0 0
      %1721 = vperm.xlu0 %1720, %v1679
      %v1722 = vpop.permute.xlu0 %1721
      %1725 = vset.pattern.permute.xlu0 0
      %1726 = vperm.xlu0 %1725, %v1680
      %v1727 = vpop.permute.xlu0 %1726
      %vm1729 = vcmask 261120
      %v1731 = vsel %vm1729, %v1705, 0
      %v1734 = vsel %vm1729, %v1706, 0
      %v1737 = vsel %vm1729, %v1707, 0
      %v1740 = vsel %vm1729, %v1708, 0
      %1742 = vmatprep.subr.mxu0 0.0
      %1743 = vmatpush1.msra.mxu0 %v1582
      %1744 = vmatprep.subr.mxu0 0.0
      %1745 = vmatpush1.msra.mxu0 %v1583
      %1746 = vmatprep.subr.mxu0 0.0
      %1747 = vmatpush1.msra.mxu0 %v1584
      %1748 = vmatprep.subr.mxu0 0.0
      %1749 = vmatpush1.msra.mxu0 %v1585
      %1750 = vmatprep.subr.mxu0 0.0
      %1751 = vmatpush1.msra.mxu0 0.0
      %1752 = vmatprep.subr.mxu0 0.0
      %1753 = vmatpush1.msra.mxu0 0.0
      %1754 = vmatprep.subr.mxu0 0.0
      %1755 = vmatpush1.msra.mxu0 0.0
      %1756 = vmatprep.subr.mxu0 0.0
      %1757 = vmatpush1.msra.mxu0 0.0
      %1758 = vmatprep.subr.mxu0 0.0
      %1759 = vmatpush1.msra.mxu0 0.0
      %1760 = vmatprep.subr.mxu0 0.0
      %1761 = vmatpush1.msra.mxu0 0.0
      %1762 = vmatprep.subr.mxu0 0.0
      %1763 = vmatpush1.msra.mxu0 0.0
      %1764 = vmatprep.subr.mxu0 0.0
      %1765 = vmatpush1.msra.mxu0 0.0
      %1766 = vmatprep.subr.mxu0 0.0
      %1767 = vmatpush1.msra.mxu0 0.0
      %1768 = vmatprep.subr.mxu0 0.0
      %1769 = vmatpush1.msra.mxu0 0.0
      %1770 = vmatprep.subr.mxu0 0.0
      %1771 = vmatpush1.msra.mxu0 0.0
      %1772 = vmatprep.subr.mxu0 0.0
      %1773 = vmatpush1.msra.mxu0 0.0
      %1774 = vmatprep.subr.mxu0 0.0
      %1775 = vmatpush1.msra.mxu0 0.0
      %1776 = vmatprep.subr.mxu0 0.0
      %1777 = vmatpush1.msra.mxu0 0.0
      %1778 = vmatprep.subr.mxu0 0.0
      %1779 = vmatpush1.msra.mxu0 0.0
      %1780 = vmatprep.subr.mxu0 0.0
      %1781 = vmatpush1.msra.mxu0 0.0
      %1782 = vmatprep.subr.mxu0 0.0
      %1783 = vmatpush1.msra.mxu0 0.0
      %1784 = vmatprep.subr.mxu0 0.0
      %1785 = vmatpush1.msra.mxu0 0.0
      %1786 = vmatprep.subr.mxu0 0.0
      %1787 = vmatpush1.msra.mxu0 0.0
      %1788 = vmatprep.subr.mxu0 0.0
      %1789 = vmatpush1.msra.mxu0 0.0
      %1790 = vmatprep.subr.mxu0 0.0
      %1791 = vmatpush1.msra.mxu0 0.0
      %1792 = vmatprep.subr.mxu0 0.0
      %1793 = vmatpush1.msra.mxu0 0.0
      %1794 = vmatprep.subr.mxu0 0.0
      %1795 = vmatpush1.msra.mxu0 0.0
      %1796 = vmatprep.subr.mxu0 0.0
      %1797 = vmatpush1.msra.mxu0 0.0
      %1798 = vmatprep.subr.mxu0 0.0
      %1799 = vmatpush1.msra.mxu0 0.0
      %1800 = vmatprep.subr.mxu0 0.0
      %1801 = vmatpush1.msra.mxu0 0.0
      %1802 = vmatprep.subr.mxu0 0.0
      %1803 = vmatpush1.msra.mxu0 0.0
      %1804 = vmatprep.subr.mxu0 0.0
      %1805 = vmatpush1.msra.mxu0 0.0
      %1806 = vmatprep.mubr.f32.mxu0 0.0
      %1807 = vmatmul.mubr.f32.gmra.mrb[0].mxu0 %v1731
      %v1808 = vpop.f32.mrb[0].mxu0
      %v1809 = vadd.f32 %v1712, %v1808
      %v1810 = vpop.f32.mrb[0].mxu0
      %1811 = vmatprep.mubr.f32.mxu0 0.0
      %1812 = vmatmul.mubr.f32.gmra.mrb[0].mxu0 %v1734
      %v1813 = vpop.f32.mrb[0].mxu0
      %v1814 = vadd.f32 %v1717, %v1813
      %v1815 = vpop.f32.mrb[0].mxu0
      %1816 = vmatprep.mubr.f32.mxu0 0.0
      %1817 = vmatmul.mubr.f32.gmra.mrb[0].mxu0 %v1737
      %v1818 = vpop.f32.mrb[0].mxu0
      %v1819 = vadd.f32 %v1722, %v1818
      %v1820 = vpop.f32.mrb[0].mxu0
      %1821 = vmatprep.mubr.f32.mxu0 0.0
      %1822 = vmatmul.mubr.f32.gmra.mrb[0].mxu0 %v1740
      %v1823 = vpop.f32.mrb[0].mxu0
      %v1824 = vadd.f32 %v1727, %v1823
      %v1825 = vpop.f32.mrb[0].mxu0
      %1826 = vdwg.mxu0
      %vm1827 = vcmp.ge.f32.partialorder %v1809, 0.0
      %vm1828 = vcmp.ge.f32.partialorder %v1814, 0.0
      %vm1829 = vcmp.ge.f32.partialorder %v1819, 0.0
      %vm1830 = vcmp.ge.f32.partialorder %v1824, 0.0
      %v1831 = vmul.f32 %v1809, 0.01
      %v1832 = vmul.f32 %v1814, 0.01
      %v1833 = vmul.f32 %v1819, 0.01
      %v1834 = vmul.f32 %v1824, 0.01
      %v1835 = vsel %vm1827, %v1809, %v1831
      %v1836 = vsel %vm1828, %v1814, %v1832
      %v1837 = vsel %vm1829, %v1819, %v1833
      %v1838 = vsel %vm1830, %v1824, %v1834
      %v1839 = vsel %vm1494, %v1835, 0.0
      %v1840 = vsel %vm1494, %v1836, 0.0
      %v1841 = vadd.f32 %v1839, %v1840
      %v1842 = vsel %vm1494, %v1837, 0.0
      %v1843 = vadd.f32 %v1841, %v1842
      %v1844 = vsel %vm1494, %v1838, 0.0
      %v1845 = vadd.f32 %v1843, %v1844
      %v1846 = vrot.slane %v1845, 4
      %v1847 = vadd.f32 %v1845, %v1846
      %v1848 = vrot.slane %v1847, 2
      %v1849 = vadd.f32 %v1847, %v1848
      %v1850 = vrot.slane %v1849, 1
      %v1851 = vadd.f32 %v1849, %v1850
      %v1852 = vmul.f32 %v1851, %v1508
      %v1853 = vsub.f32 %v1835, %v1852
      %v1854 = vsub.f32 %v1836, %v1852
      %v1855 = vsub.f32 %v1837, %v1852
      %v1856 = vsub.f32 %v1838, %v1852
      %v1857 = vmul.f32 %v1853, %v1853
      %v1858 = vmul.f32 %v1854, %v1854
      %v1859 = vmul.f32 %v1855, %v1855
      %v1860 = vmul.f32 %v1856, %v1856
      %v1861 = vsel %vm1494, %v1857, 0.0
      %v1862 = vsel %vm1494, %v1858, 0.0
      %v1863 = vadd.f32 %v1861, %v1862
      %v1864 = vsel %vm1494, %v1859, 0.0
      %v1865 = vadd.f32 %v1863, %v1864
      %v1866 = vsel %vm1494, %v1860, 0.0
      %v1867 = vadd.f32 %v1865, %v1866
      %v1868 = vrot.slane %v1867, 4
      %v1869 = vadd.f32 %v1867, %v1868
      %v1870 = vrot.slane %v1869, 2
      %v1871 = vadd.f32 %v1869, %v1870
      %v1872 = vrot.slane %v1871, 1
      %v1873 = vadd.f32 %v1871, %v1872
      %v1874 = vmul.f32 %v1873, %v1508
      %v1875 = vadd.f32 %v1874, 1e-05
      %v1876 = vrsqrt.pop %v1875
      %v1877 = vmul.f32 %v1853, %v1876
      %v1878 = vmul.f32 %v1854, %v1876
      %v1879 = vmul.f32 %v1855, %v1876
      %v1880 = vmul.f32 %v1856, %v1876
      %1882 = vset.pattern.permute.xlu0 0
      %1883 = vperm.xlu0 %1882, %v1686
      %v1884 = vpop.permute.xlu0 %1883
      %1887 = vset.pattern.permute.xlu0 0
      %1888 = vperm.xlu0 %1887, %v1687
      %v1889 = vpop.permute.xlu0 %1888
      %1892 = vset.pattern.permute.xlu0 0
      %1893 = vperm.xlu0 %1892, %v1688
      %v1894 = vpop.permute.xlu0 %1893
      %1897 = vset.pattern.permute.xlu0 0
      %1898 = vperm.xlu0 %1897, %v1689
      %v1899 = vpop.permute.xlu0 %1898
      %v1901 = vmul.f32 %v1877, %v1884
      %v1902 = vmul.f32 %v1878, %v1889
      %v1903 = vmul.f32 %v1879, %v1894
      %v1904 = vmul.f32 %v1880, %v1899
      %1906 = vset.pattern.permute.xlu0 0
      %1907 = vperm.xlu0 %1906, %v1695
      %v1908 = vpop.permute.xlu0 %1907
      %1911 = vset.pattern.permute.xlu0 0
      %1912 = vperm.xlu0 %1911, %v1696
      %v1913 = vpop.permute.xlu0 %1912
      %1916 = vset.pattern.permute.xlu0 0
      %1917 = vperm.xlu0 %1916, %v1697
      %v1918 = vpop.permute.xlu0 %1917
      %1921 = vset.pattern.permute.xlu0 0
      %1922 = vperm.xlu0 %1921, %v1698
      %v1923 = vpop.permute.xlu0 %1922
      %v1925 = vadd.f32 %v1901, %v1908
      %v1926 = vadd.f32 %v1902, %v1913
      %v1927 = vadd.f32 %v1903, %v1918
      %v1928 = vadd.f32 %v1904, %v1923
      %s1929 = scalar_lea.vmem %s13, %s1703
      %v1930 = vld [vmem:[%s1929] sm:$0xff]
      %v1931 = vld [vmem:[%s1929 + $0x8] sm:$0xff]
      %v1932 = vld [vmem:[%s1929 + $0x10] sm:$0xff]
      %v1933 = vld [vmem:[%s1929 + $0x18] sm:$0xff]
      %1935 = vset.pattern.permute.xlu0 0
      %1936 = vperm.xlu0 %1935, %v1681
      %v1937 = vpop.permute.xlu0 %1936
      %1940 = vset.pattern.permute.xlu0 0
      %1941 = vperm.xlu0 %1940, %v1682
      %v1942 = vpop.permute.xlu0 %1941
      %1945 = vset.pattern.permute.xlu0 0
      %1946 = vperm.xlu0 %1945, %v1683
      %v1947 = vpop.permute.xlu0 %1946
      %1950 = vset.pattern.permute.xlu0 0
      %1951 = vperm.xlu0 %1950, %v1684
      %v1952 = vpop.permute.xlu0 %1951
      %v1955 = vsel %vm1729, %v1930, 0
      %v1958 = vsel %vm1729, %v1931, 0
      %v1961 = vsel %vm1729, %v1932, 0
      %v1964 = vsel %vm1729, %v1933, 0
      %1966 = vmatprep.subr.mxu0 0.0
      %1967 = vmatpush1.msra.mxu0 %v1672
      %1968 = vmatprep.subr.mxu0 0.0
      %1969 = vmatpush1.msra.mxu0 %v1673
      %1970 = vmatprep.subr.mxu0 0.0
      %1971 = vmatpush1.msra.mxu0 %v1674
      %1972 = vmatprep.subr.mxu0 0.0
      %1973 = vmatpush1.msra.mxu0 %v1675
      %1974 = vmatprep.subr.mxu0 0.0
      %1975 = vmatpush1.msra.mxu0 0.0
      %1976 = vmatprep.subr.mxu0 0.0
      %1977 = vmatpush1.msra.mxu0 0.0
      %1978 = vmatprep.subr.mxu0 0.0
      %1979 = vmatpush1.msra.mxu0 0.0
      %1980 = vmatprep.subr.mxu0 0.0
      %1981 = vmatpush1.msra.mxu0 0.0
      %1982 = vmatprep.subr.mxu0 0.0
      %1983 = vmatpush1.msra.mxu0 0.0
      %1984 = vmatprep.subr.mxu0 0.0
      %1985 = vmatpush1.msra.mxu0 0.0
      %1986 = vmatprep.subr.mxu0 0.0
      %1987 = vmatpush1.msra.mxu0 0.0
      %1988 = vmatprep.subr.mxu0 0.0
      %1989 = vmatpush1.msra.mxu0 0.0
      %1990 = vmatprep.subr.mxu0 0.0
      %1991 = vmatpush1.msra.mxu0 0.0
      %1992 = vmatprep.subr.mxu0 0.0
      %1993 = vmatpush1.msra.mxu0 0.0
      %1994 = vmatprep.subr.mxu0 0.0
      %1995 = vmatpush1.msra.mxu0 0.0
      %1996 = vmatprep.subr.mxu0 0.0
      %1997 = vmatpush1.msra.mxu0 0.0
      %1998 = vmatprep.subr.mxu0 0.0
      %1999 = vmatpush1.msra.mxu0 0.0
      %2000 = vmatprep.subr.mxu0 0.0
      %2001 = vmatpush1.msra.mxu0 0.0
      %2002 = vmatprep.subr.mxu0 0.0
      %2003 = vmatpush1.msra.mxu0 0.0
      %2004 = vmatprep.subr.mxu0 0.0
      %2005 = vmatpush1.msra.mxu0 0.0
      %2006 = vmatprep.subr.mxu0 0.0
      %2007 = vmatpush1.msra.mxu0 0.0
      %2008 = vmatprep.subr.mxu0 0.0
      %2009 = vmatpush1.msra.mxu0 0.0
      %2010 = vmatprep.subr.mxu0 0.0
      %2011 = vmatpush1.msra.mxu0 0.0
      %2012 = vmatprep.subr.mxu0 0.0
      %2013 = vmatpush1.msra.mxu0 0.0
      %2014 = vmatprep.subr.mxu0 0.0
      %2015 = vmatpush1.msra.mxu0 0.0
      %2016 = vmatprep.subr.mxu0 0.0
      %2017 = vmatpush1.msra.mxu0 0.0
      %2018 = vmatprep.subr.mxu0 0.0
      %2019 = vmatpush1.msra.mxu0 0.0
      %2020 = vmatprep.subr.mxu0 0.0
      %2021 = vmatpush1.msra.mxu0 0.0
      %2022 = vmatprep.subr.mxu0 0.0
      %2023 = vmatpush1.msra.mxu0 0.0
      %2024 = vmatprep.subr.mxu0 0.0
      %2025 = vmatpush1.msra.mxu0 0.0
      %2026 = vmatprep.subr.mxu0 0.0
      %2027 = vmatpush1.msra.mxu0 0.0
      %2028 = vmatprep.subr.mxu0 0.0
      %2029 = vmatpush1.msra.mxu0 0.0
      %2030 = vmatprep.mubr.f32.mxu0 0.0
      %2031 = vmatmul.mubr.f32.gmra.mrb[0].mxu0 %v1955
      %v2032 = vpop.f32.mrb[0].mxu0
      %v2033 = vadd.f32 %v1937, %v2032
      %v2034 = vpop.f32.mrb[0].mxu0
      %2035 = vmatprep.mubr.f32.mxu0 0.0
      %2036 = vmatmul.mubr.f32.gmra.mrb[0].mxu0 %v1958
      %v2037 = vpop.f32.mrb[0].mxu0
      %v2038 = vadd.f32 %v1942, %v2037
      %v2039 = vpop.f32.mrb[0].mxu0
      %2040 = vmatprep.mubr.f32.mxu0 0.0
      %2041 = vmatmul.mubr.f32.gmra.mrb[0].mxu0 %v1961
      %v2042 = vpop.f32.mrb[0].mxu0
      %v2043 = vadd.f32 %v1947, %v2042
      %v2044 = vpop.f32.mrb[0].mxu0
      %2045 = vmatprep.mubr.f32.mxu0 0.0
      %2046 = vmatmul.mubr.f32.gmra.mrb[0].mxu0 %v1964
      %v2047 = vpop.f32.mrb[0].mxu0
      %v2048 = vadd.f32 %v1952, %v2047
      %v2049 = vpop.f32.mrb[0].mxu0
      %2050 = vdwg.mxu0
      %vm2051 = vcmp.ge.f32.partialorder %v2033, 0.0
      %vm2052 = vcmp.ge.f32.partialorder %v2038, 0.0
      %vm2053 = vcmp.ge.f32.partialorder %v2043, 0.0
      %vm2054 = vcmp.ge.f32.partialorder %v2048, 0.0
      %v2055 = vmul.f32 %v2033, 0.01
      %v2056 = vmul.f32 %v2038, 0.01
      %v2057 = vmul.f32 %v2043, 0.01
      %v2058 = vmul.f32 %v2048, 0.01
      %v2059 = vsel %vm2051, %v2033, %v2055
      %v2060 = vsel %vm2052, %v2038, %v2056
      %v2061 = vsel %vm2053, %v2043, %v2057
      %v2062 = vsel %vm2054, %v2048, %v2058
      %v2063 = vsel %vm1494, %v2059, 0.0
      %v2064 = vsel %vm1494, %v2060, 0.0
      %v2065 = vadd.f32 %v2063, %v2064
      %v2066 = vsel %vm1494, %v2061, 0.0
      %v2067 = vadd.f32 %v2065, %v2066
      %v2068 = vsel %vm1494, %v2062, 0.0
      %v2069 = vadd.f32 %v2067, %v2068
      %v2070 = vrot.slane %v2069, 4
      %v2071 = vadd.f32 %v2069, %v2070
      %v2072 = vrot.slane %v2071, 2
      %v2073 = vadd.f32 %v2071, %v2072
      %v2074 = vrot.slane %v2073, 1
      %v2075 = vadd.f32 %v2073, %v2074
      %v2076 = vmul.f32 %v2075, %v1508
      %v2077 = vsub.f32 %v2059, %v2076
      %v2078 = vsub.f32 %v2060, %v2076
      %v2079 = vsub.f32 %v2061, %v2076
      %v2080 = vsub.f32 %v2062, %v2076
      %v2081 = vmul.f32 %v2077, %v2077
      %v2082 = vmul.f32 %v2078, %v2078
      %v2083 = vmul.f32 %v2079, %v2079
      %v2084 = vmul.f32 %v2080, %v2080
      %v2085 = vsel %vm1494, %v2081, 0.0
      %v2086 = vsel %vm1494, %v2082, 0.0
      %v2087 = vadd.f32 %v2085, %v2086
      %v2088 = vsel %vm1494, %v2083, 0.0
      %v2089 = vadd.f32 %v2087, %v2088
      %v2090 = vsel %vm1494, %v2084, 0.0
      %v2091 = vadd.f32 %v2089, %v2090
      %v2092 = vrot.slane %v2091, 4
      %v2093 = vadd.f32 %v2091, %v2092
      %v2094 = vrot.slane %v2093, 2
      %v2095 = vadd.f32 %v2093, %v2094
      %v2096 = vrot.slane %v2095, 1
      %v2097 = vadd.f32 %v2095, %v2096
      %v2098 = vmul.f32 %v2097, %v1508
      %v2099 = vadd.f32 %v2098, 1e-05
      %v2100 = vrsqrt.pop %v2099
      %v2101 = vmul.f32 %v2077, %v2100
      %v2102 = vmul.f32 %v2078, %v2100
      %v2103 = vmul.f32 %v2079, %v2100
      %v2104 = vmul.f32 %v2080, %v2100
      %2106 = vset.pattern.permute.xlu0 0
      %2107 = vperm.xlu0 %2106, %v1690
      %v2108 = vpop.permute.xlu0 %2107
      %2111 = vset.pattern.permute.xlu0 0
      %2112 = vperm.xlu0 %2111, %v1691
      %v2113 = vpop.permute.xlu0 %2112
      %2116 = vset.pattern.permute.xlu0 0
      %2117 = vperm.xlu0 %2116, %v1692
      %v2118 = vpop.permute.xlu0 %2117
      %2121 = vset.pattern.permute.xlu0 0
      %2122 = vperm.xlu0 %2121, %v1693
      %v2123 = vpop.permute.xlu0 %2122
      %v2125 = vmul.f32 %v2101, %v2108
      %v2126 = vmul.f32 %v2102, %v2113
      %v2127 = vmul.f32 %v2103, %v2118
      %v2128 = vmul.f32 %v2104, %v2123
      %2130 = vset.pattern.permute.xlu0 0
      %2131 = vperm.xlu0 %2130, %v1699
      %v2132 = vpop.permute.xlu0 %2131
      %2135 = vset.pattern.permute.xlu0 0
      %2136 = vperm.xlu0 %2135, %v1700
      %v2137 = vpop.permute.xlu0 %2136
      %2140 = vset.pattern.permute.xlu0 0
      %2141 = vperm.xlu0 %2140, %v1701
      %v2142 = vpop.permute.xlu0 %2141
      %2145 = vset.pattern.permute.xlu0 0
      %2146 = vperm.xlu0 %2145, %v1702
      %v2147 = vpop.permute.xlu0 %2146
      %v2149 = vadd.f32 %v2125, %v2132
      %v2150 = vadd.f32 %v2126, %v2137
      %v2151 = vadd.f32 %v2127, %v2142
      %v2152 = vadd.f32 %v2128, %v2147
      %s2153 = scalar_lea.vmem %s17, %s800
      %v2154 = vld [vmem:[%s2153] sm:$0x3]
      %s2155 = scalar_lea.vmem %s19, %s800
      %v2156 = vld [vmem:[%s2155] sm:$0x3]
      %2158 = vset.pattern.permute.xlu0 0
      %2159 = vperm.xlu0 %2158, %v2156
      %v2160 = vpop.permute.xlu0 %2159
      %v2163 = vsel %vm1729, %v2154, 0
      %2165 = vmatprep.subr.mxu0 0.0
      %2166 = vmatpush1.msra.mxu0 %v1925
      %2167 = vmatprep.subr.mxu0 0.0
      %2168 = vmatpush1.msra.mxu0 %v1926
      %2169 = vmatprep.subr.mxu0 0.0
      %2170 = vmatpush1.msra.mxu0 %v1927
      %2171 = vmatprep.subr.mxu0 0.0
      %2172 = vmatpush1.msra.mxu0 %v1928
      %2173 = vmatprep.subr.mxu0 0.0
      %2174 = vmatpush1.msra.mxu0 0.0
      %2175 = vmatprep.subr.mxu0 0.0
      %2176 = vmatpush1.msra.mxu0 0.0
      %2177 = vmatprep.subr.mxu0 0.0
      %2178 = vmatpush1.msra.mxu0 0.0
      %2179 = vmatprep.subr.mxu0 0.0
      %2180 = vmatpush1.msra.mxu0 0.0
      %2181 = vmatprep.subr.mxu0 0.0
      %2182 = vmatpush1.msra.mxu0 0.0
      %2183 = vmatprep.subr.mxu0 0.0
      %2184 = vmatpush1.msra.mxu0 0.0
      %2185 = vmatprep.subr.mxu0 0.0
      %2186 = vmatpush1.msra.mxu0 0.0
      %2187 = vmatprep.subr.mxu0 0.0
      %2188 = vmatpush1.msra.mxu0 0.0
      %2189 = vmatprep.subr.mxu0 0.0
      %2190 = vmatpush1.msra.mxu0 0.0
      %2191 = vmatprep.subr.mxu0 0.0
      %2192 = vmatpush1.msra.mxu0 0.0
      %2193 = vmatprep.subr.mxu0 0.0
      %2194 = vmatpush1.msra.mxu0 0.0
      %2195 = vmatprep.subr.mxu0 0.0
      %2196 = vmatpush1.msra.mxu0 0.0
      %2197 = vmatprep.subr.mxu0 0.0
      %2198 = vmatpush1.msra.mxu0 0.0
      %2199 = vmatprep.subr.mxu0 0.0
      %2200 = vmatpush1.msra.mxu0 0.0
      %2201 = vmatprep.subr.mxu0 0.0
      %2202 = vmatpush1.msra.mxu0 0.0
      %2203 = vmatprep.subr.mxu0 0.0
      %2204 = vmatpush1.msra.mxu0 0.0
      %2205 = vmatprep.subr.mxu0 0.0
      %2206 = vmatpush1.msra.mxu0 0.0
      %2207 = vmatprep.subr.mxu0 0.0
      %2208 = vmatpush1.msra.mxu0 0.0
      %2209 = vmatprep.subr.mxu0 0.0
      %2210 = vmatpush1.msra.mxu0 0.0
      %2211 = vmatprep.subr.mxu0 0.0
      %2212 = vmatpush1.msra.mxu0 0.0
      %2213 = vmatprep.subr.mxu0 0.0
      %2214 = vmatpush1.msra.mxu0 0.0
      %2215 = vmatprep.subr.mxu0 0.0
      %2216 = vmatpush1.msra.mxu0 0.0
      %2217 = vmatprep.subr.mxu0 0.0
      %2218 = vmatpush1.msra.mxu0 0.0
      %2219 = vmatprep.subr.mxu0 0.0
      %2220 = vmatpush1.msra.mxu0 0.0
      %2221 = vmatprep.subr.mxu0 0.0
      %2222 = vmatpush1.msra.mxu0 0.0
      %2223 = vmatprep.subr.mxu0 0.0
      %2224 = vmatpush1.msra.mxu0 0.0
      %2225 = vmatprep.subr.mxu0 0.0
      %2226 = vmatpush1.msra.mxu0 0.0
      %2227 = vmatprep.subr.mxu0 0.0
      %2228 = vmatpush1.msra.mxu0 0.0
      %2229 = vmatprep.mubr.f32.mxu0 0.0
      %2230 = vmatmul.mubr.f32.gmra.mrb[0].mxu0 %v2163
      %v2231 = vpop.f32.mrb[0].mxu0
      %v2232 = vadd.f32 %v2160, %v2231
      %v2233 = vpop.f32.mrb[0].mxu0
      %2234 = vdwg.mxu0
      %s2235 = scalar_lea.vmem %s18, %s800
      %v2236 = vld [vmem:[%s2235] sm:$0x3]
      %s2237 = scalar_lea.vmem %s20, %s800
      %v2238 = vld [vmem:[%s2237] sm:$0x3]
      %2240 = vset.pattern.permute.xlu0 0
      %2241 = vperm.xlu0 %2240, %v2238
      %v2242 = vpop.permute.xlu0 %2241
      %v2245 = vsel %vm1729, %v2236, 0
      %2247 = vmatprep.subr.mxu0 0.0
      %2248 = vmatpush1.msra.mxu0 %v2149
      %2249 = vmatprep.subr.mxu0 0.0
      %2250 = vmatpush1.msra.mxu0 %v2150
      %2251 = vmatprep.subr.mxu0 0.0
      %2252 = vmatpush1.msra.mxu0 %v2151
      %2253 = vmatprep.subr.mxu0 0.0
      %2254 = vmatpush1.msra.mxu0 %v2152
      %2255 = vmatprep.subr.mxu0 0.0
      %2256 = vmatpush1.msra.mxu0 0.0
      %2257 = vmatprep.subr.mxu0 0.0
      %2258 = vmatpush1.msra.mxu0 0.0
      %2259 = vmatprep.subr.mxu0 0.0
      %2260 = vmatpush1.msra.mxu0 0.0
      %2261 = vmatprep.subr.mxu0 0.0
      %2262 = vmatpush1.msra.mxu0 0.0
      %2263 = vmatprep.subr.mxu0 0.0
      %2264 = vmatpush1.msra.mxu0 0.0
      %2265 = vmatprep.subr.mxu0 0.0
      %2266 = vmatpush1.msra.mxu0 0.0
      %2267 = vmatprep.subr.mxu0 0.0
      %2268 = vmatpush1.msra.mxu0 0.0
      %2269 = vmatprep.subr.mxu0 0.0
      %2270 = vmatpush1.msra.mxu0 0.0
      %2271 = vmatprep.subr.mxu0 0.0
      %2272 = vmatpush1.msra.mxu0 0.0
      %2273 = vmatprep.subr.mxu0 0.0
      %2274 = vmatpush1.msra.mxu0 0.0
      %2275 = vmatprep.subr.mxu0 0.0
      %2276 = vmatpush1.msra.mxu0 0.0
      %2277 = vmatprep.subr.mxu0 0.0
      %2278 = vmatpush1.msra.mxu0 0.0
      %2279 = vmatprep.subr.mxu0 0.0
      %2280 = vmatpush1.msra.mxu0 0.0
      %2281 = vmatprep.subr.mxu0 0.0
      %2282 = vmatpush1.msra.mxu0 0.0
      %2283 = vmatprep.subr.mxu0 0.0
      %2284 = vmatpush1.msra.mxu0 0.0
      %2285 = vmatprep.subr.mxu0 0.0
      %2286 = vmatpush1.msra.mxu0 0.0
      %2287 = vmatprep.subr.mxu0 0.0
      %2288 = vmatpush1.msra.mxu0 0.0
      %2289 = vmatprep.subr.mxu0 0.0
      %2290 = vmatpush1.msra.mxu0 0.0
      %2291 = vmatprep.subr.mxu0 0.0
      %2292 = vmatpush1.msra.mxu0 0.0
      %2293 = vmatprep.subr.mxu0 0.0
      %2294 = vmatpush1.msra.mxu0 0.0
      %2295 = vmatprep.subr.mxu0 0.0
      %2296 = vmatpush1.msra.mxu0 0.0
      %2297 = vmatprep.subr.mxu0 0.0
      %2298 = vmatpush1.msra.mxu0 0.0
      %2299 = vmatprep.subr.mxu0 0.0
      %2300 = vmatpush1.msra.mxu0 0.0
      %2301 = vmatprep.subr.mxu0 0.0
      %2302 = vmatpush1.msra.mxu0 0.0
      %2303 = vmatprep.subr.mxu0 0.0
      %2304 = vmatpush1.msra.mxu0 0.0
      %2305 = vmatprep.subr.mxu0 0.0
      %2306 = vmatpush1.msra.mxu0 0.0
      %2307 = vmatprep.subr.mxu0 0.0
      %2308 = vmatpush1.msra.mxu0 0.0
      %2309 = vmatprep.subr.mxu0 0.0
      %2310 = vmatpush1.msra.mxu0 0.0
      %2311 = vmatprep.mubr.f32.mxu0 0.0
      %2312 = vmatmul.mubr.f32.gmra.mrb[0].mxu0 %v2245
      %v2313 = vpop.f32.mrb[0].mxu0
      %v2314 = vadd.f32 %v2242, %v2313
      %v2315 = vpop.f32.mrb[0].mxu0
      %2316 = vdwg.mxu0
      %v2317 = vsub.f32 %v1106, %v2314
      %v2318 = vsub.f32 0.0, %v2232
      %v2319 = vmul.f32 %v2318, 1.442695
      %v2320 = vpow.pop %v2319
      %v2321 = vmul.f32 %v2317, %v2320
      %vm2322 = vcmask 58368
      %2323 = vst.msk [vmem:[#allocation2] sm:$0x3] %vm2322, %v956
      %2324 = vst.msk [vmem:[#allocation3] sm:$0x3] %vm2322, %v2321
      %2325 = vst.msk [vmem:[%s776] sm:$0x3] %vm2322, %v956
      %2326 = vst.msk [vmem:[%s783] sm:$0x3] %vm2322, %v2321
      %v2327 = vld [vmem:[%s786] sm:$0x1]
      %v2328 = vsel %vm2322, %v2232, 0.0
      %v2329 = vrot.slane %v2328, 4
      %v2330 = vadd.f32 %v2328, %v2329
      %v2331 = vrot.slane %v2330, 2
      %v2332 = vadd.f32 %v2330, %v2331
      %v2333 = vrot.slane %v2332, 1
      %v2334 = vadd.f32 %v2332, %v2333
      %v2335 = vsub.f32 %v2327, %v2334
      %vm2336 = vcmask 57344
      %2337 = vst.msk [vmem:[%s786] sm:$0x1] %vm2336, %v2335
      %p2338 = scmp.lt.s32.totalorder %s40, 1
      %s2339 = scalar_select %p2338, %s40, 1
      %p2340 = scmp.lt.s32.totalorder %s39, 0
      %s2341 = scalar_select %p2340, %s39, 0
      %s2342 = sadd.s32 %s2341, %s2339
      %s2343 = smul.addr %s2342, 2
      %s2344 = scalar_lea.vmem %s21, %s2343
      %p2345 = scmp.lt.s32.totalorder %s40, 1
      %s2346 = scalar_select %p2345, %s40, 1
      %p2347 = scmp.lt.s32.totalorder %s39, 0
      %s2348 = scalar_select %p2347, %s39, 0
      %s2349 = sadd.s32 %s2348, %s2346
      %s2350 = smul.addr %s2349, 2
      %s2351 = scalar_lea.vmem %s22, %s2350
      %p2352 = scmp.lt.s32.totalorder %s39, 0
      %s2353 = scalar_select %p2352, %s39, 0
      %s2354 = scalar_lea.vmem %s23, %s2353
      // Predicated region
      $region109: #{_lambda_.1} parent=103 // pred_check
        %p2355 = pneg %p523
      $region110: #{_lambda_.1} parent=103 // pred_check_branch
        %2357 = sbr.rel (%p2355) target = $region112
      $region111: #{_lambda_.1} parent=103 // pred_region
        _
      $region112: #{_lambda_.1} parent=103 // pred_fallthru
        _
      // Predicated region
      $region113: #{_lambda_.1} parent=103 // pred_check
        %p2358 = pneg %p551
      $region114: #{_lambda_.1} parent=103 // pred_check_branch
        %2360 = sbr.rel (%p2358) target = $region116
      $region115: #{_lambda_.1} parent=103 // pred_region
        _
      $region116: #{_lambda_.1} parent=103 // pred_fallthru
        _
      // Predicated region
      $region117: #{_lambda_.1} parent=103 // pred_check
        %p2361 = pneg %p577
      $region118: #{_lambda_.1} parent=103 // pred_check_branch
        %2363 = sbr.rel (%p2361) target = $region120
      $region119: #{_lambda_.1} parent=103 // pred_region
        _
      $region120: #{_lambda_.1} parent=103 // pred_fallthru
        _
      // Predicated region
      $region121: #{_lambda_.1} parent=103 // pred_check
        %p2364 = pneg %p577
      $region122: #{_lambda_.1} parent=103 // pred_check_branch
        %2366 = sbr.rel (%p2364) target = $region124
      $region123: #{_lambda_.1} parent=103 // pred_region
        %p2367 = scmp.lt.s32.totalorder %s39, 0
        %s2368 = scalar_select %p2367, %s39, 0
        %s2369 = scalar_lea.vmem %s23, %s2368
      $region124: #{_lambda_.1} parent=103 // pred_fallthru
        _
    $region104: #{_lambda_.1} parent=5 // pred_fallthru
      _
    %p2370 = scmp.le.s32.totalorder 2, %s30
    // Predicated region
    $region125: #{_lambda_.1} parent=5 // pred_check
      %p2371 = pneg %p2370
    $region126: #{_lambda_.1} parent=5 // pred_check_branch
      %2373 = sbr.rel (%p2371) target = $region128
    $region127: #{_lambda_.1} parent=5 // pred_region
      %s2374 = ssub.s32 %s30, 2
      // Predicated region
      $region129: #{_lambda_.1} parent=127 // pred_check
        %p2375 = pneg %p529
      $region130: #{_lambda_.1} parent=127 // pred_check_branch
        %2377 = sbr.rel (%p2375) target = $region132
      $region131: #{_lambda_.1} parent=127 // pred_region
        %p2378 = scmp.lt.s32.totalorder %s42, 1
        %s2379 = scalar_select %p2378, %s42, 1
        %p2380 = scmp.lt.s32.totalorder %s41, 0
        %s2381 = scalar_select %p2380, %s41, 0
        %s2382 = sadd.s32 %s2381, %s2379
        %s2383 = smul.addr %s2382, 2
        %s2384 = scalar_lea.vmem %s21, %s2383
      $region132: #{_lambda_.1} parent=127 // pred_fallthru
        _
      // Predicated region
      $region133: #{_lambda_.1} parent=127 // pred_check
        %p2385 = pneg %p557
      $region134: #{_lambda_.1} parent=127 // pred_check_branch
        %2387 = sbr.rel (%p2385) target = $region136
      $region135: #{_lambda_.1} parent=127 // pred_region
        %p2388 = scmp.lt.s32.totalorder %s42, 1
        %s2389 = scalar_select %p2388, %s42, 1
        %p2390 = scmp.lt.s32.totalorder %s41, 0
        %s2391 = scalar_select %p2390, %s41, 0
        %s2392 = sadd.s32 %s2391, %s2389
        %s2393 = smul.addr %s2392, 2
        %s2394 = scalar_lea.vmem %s22, %s2393
      $region136: #{_lambda_.1} parent=127 // pred_fallthru
        _
    $region128: #{_lambda_.1} parent=5 // pred_fallthru
      _
  $region6: #{_lambda_.1} parent=0 // loop_footer
    %s34 = sadd.s32 1, %s30
  $region7: #{_lambda_.1} parent=0 // loop_footer_branch
    %29 = sbr.rel target = $region3
  $region8: #{_lambda_.1} parent=0 // loop_exit
    _

</llo_original>
